<compile_context>
chip_gen: v6e
topology: v6e:2x2x1
jax: 0.10.0
libtpu: 0.0.40
codegen_flags: <defaults>
</compile_context>

<pallas_src>
import functools

import jax
import jax.numpy as jnp
import numpy as np
from jax.experimental import pallas as pl
from jax.experimental.pallas import tpu as pltpu

# Layer sizes from DeepTable.__init__
D0_IN, D0_OUT = 1, 64     # equiv_0
D1_IN, D1_OUT = 64, 128   # inv_0
D2_IN, D2_OUT = 128, 256  # equiv_1
D3_IN, D3_OUT = 256, 512  # inv_1


def _deep_table_kernel(x_ref, w1_ref, b1_ref, w2_ref, i0bias_ref,
                       e1a_ref, e1b_ref, e1bias_ref, i1b_ref, i1bias_ref,
                       pavg_ref, pbrd_ref, o_ref, *, tables_per_step):
    """Fused DeepTable forward for `tables_per_step` tables (R = TB*N set rows).

    Shapes per grid step (R = TB*N):
      x:  (R, M)            w1: (M, 64*M)         b1: (1, 64*M)
      w2: (64*M, 128)       i0bias: (1, 128)
      e1a/e1b: (128, 256)   e1bias: (1, 256)
      i1b: (256, 512)       i1bias: (1, 512)
      pavg: (TB, R)  block-diag averaging (1/N)    pbrd: (R, TB) row-broadcast
      out: (TB, 1, 512)
    """
    f32 = jnp.float32

    # ---------------- Stage 1: per-column set over M scalar cells --------------
    # z[r, m*64+f] = x[r,m]*alpha[f] + mean_m(x[r,:])*beta[f] + bias[f]
    x = x_ref[...]                                                      # (R, M)
    z = jnp.dot(x, w1_ref[...], preferred_element_type=f32) + b1_ref[...]
    z = jnp.maximum(z, 0.0)                                             # (R, 64*M)
    # mean over m of relu(.) followed by inv0_beta, folded into one matmul.
    h1 = jnp.dot(z, w2_ref[...], preferred_element_type=f32) + i0bias_ref[...]
    # h1: (R, 128) — stays in VMEM/vregs, never written to HBM.

    # ---------------- Stage 2: per-table set over N column embeddings ----------
    pavg = pavg_ref[...]                                                # (TB, R)
    mh = jnp.dot(pavg, h1, preferred_element_type=f32)                  # (TB, 128) per-table mean
    mt = (jnp.dot(mh, e1b_ref[...], preferred_element_type=f32)
          + e1bias_ref[...])                                            # (TB, 256)
    if tables_per_step == 1:
        bc = mt                                                         # broadcast over rows
    else:
        bc = jnp.dot(pbrd_ref[...], mt, preferred_element_type=f32)     # (R, 256)
    g = jnp.maximum(jnp.dot(h1, e1a_ref[...], preferred_element_type=f32) + bc, 0.0)
    gm = jnp.dot(pavg, g, preferred_element_type=f32)                   # (TB, 256) per-table mean
    o_ref[:, 0, :] = (jnp.dot(gm, i1b_ref[...], preferred_element_type=f32)
                      + i1bias_ref[...])                                # (TB, 512)


def _pick_tables_per_step(B, N, target_rows=256):
    """Largest divisor TB of B with TB*N a sublane multiple, ~target_rows rows,
    and (when possible) >= 2 grid steps so v7x/megacore can shard the grid."""
    cap = max(1, target_rows // max(N, 1))
    if B >= 2:
        cap = min(cap, max(1, B // 2))
    best = None
    for d in range(1, min(cap, B) + 1):
        if B % d == 0 and (d * N) % 8 == 0:
            best = d
    return best if best is not None else B   # TB=B => block == full array (always legal)


def deep_table_forward(x, p, *, target_rows=256):
    B, N, M = x.shape
    TB = _pick_tables_per_step(B, N, target_rows)
    R = TB * N
    G = B // TB

    x2 = x.reshape(B * N, M).astype(jnp.float32)     # unsqueeze(-1)+flatten(0,1), feat dim folded

    # ---- Fold the stage-1 weights so the kernel is pure matmul + relu ----------
    f32 = jnp.float32
    alpha = p["equiv0_alpha"].astype(f32)            # (1, 64)
    beta = p["equiv0_beta"].astype(f32)              # (1, 64)
    eye_m = jnp.eye(M, dtype=f32)
    # w1[m', m*64+f] = alpha[f]*delta(m,m') + beta[f]/M
    w1 = (eye_m[:, :, None] * alpha[0][None, None, :]
          + jnp.full((M, M, 1), 1.0 / M, f32) * beta[0][None, None, :]
          ).reshape(M, M * D0_OUT)                   # (M, 64*M)
    b1 = jnp.tile(p["equiv0_bias"].astype(f32), (1, M))          # (1, 64*M)
    w2 = jnp.tile(p["inv0_beta"].astype(f32), (M, 1)) * (1.0 / M)  # (64*M, 128)

    # ---- Block-diagonal set-mean / broadcast matrices for stage 2 --------------
    eye_tb = jnp.eye(TB, dtype=f32)
    pavg = jnp.repeat(eye_tb, N, axis=1) * (1.0 / N)   # (TB, R): per-table mean over N rows
    pbrd = jnp.repeat(eye_tb, N, axis=0)               # (R, TB): broadcast table row to its N rows

    out = pl.pallas_call(
        functools.partial(_deep_table_kernel, tables_per_step=TB),
        out_shape=jax.ShapeDtypeStruct((B, 1, D3_OUT), jnp.float32),
        grid=(G,),
        in_specs=[
            pl.BlockSpec((R, M), lambda i: (i, 0)),                    # x rows for this step
            pl.BlockSpec((M, M * D0_OUT), lambda i: (0, 0)),           # w1 (DMA'd once)
            pl.BlockSpec((1, M * D0_OUT), lambda i: (0, 0)),           # b1
            pl.BlockSpec((M * D0_OUT, D1_OUT), lambda i: (0, 0)),      # w2
            pl.BlockSpec((1, D1_OUT), lambda i: (0, 0)),               # inv0 bias
            pl.BlockSpec((D2_IN, D2_OUT), lambda i: (0, 0)),           # equiv1 alpha
            pl.BlockSpec((D2_IN, D2_OUT), lambda i: (0, 0)),           # equiv1 beta
            pl.BlockSpec((1, D2_OUT), lambda i: (0, 0)),               # equiv1 bias
            pl.BlockSpec((D3_IN, D3_OUT), lambda i: (0, 0)),           # inv1 beta
            pl.BlockSpec((1, D3_OUT), lambda i: (0, 0)),               # inv1 bias
            pl.BlockSpec((TB, R), lambda i: (0, 0)),                   # averaging matrix
            pl.BlockSpec((R, TB), lambda i: (0, 0)),                   # broadcast matrix
        ],
        out_specs=pl.BlockSpec((TB, 1, D3_OUT), lambda i: (i, 0, 0)),
        compiler_params=pltpu.CompilerParams(dimension_semantics=("parallel",)),
    )(x2, w1, b1, w2, p["inv0_bias"].astype(f32),
      p["equiv1_alpha"].astype(f32), p["equiv1_beta"].astype(f32),
      p["equiv1_bias"].astype(f32),
      p["inv1_beta"].astype(f32), p["inv1_bias"].astype(f32),
      pavg, pbrd)

    return out.reshape(B, D3_OUT)


def deep_table_reference(x, p):
    """Pure-JAX reference mirroring the PyTorch forward."""
    B, N, M = x.shape
    z = x.reshape(B * N, M, 1)                                        # unsqueeze + flatten(0,1)
    h = (z @ p["equiv0_alpha"]
         + z.mean(1, keepdims=True) @ p["equiv0_beta"] + p["equiv0_bias"])
    h = jnp.maximum(h, 0.0)
    h = h.mean(1) @ p["inv0_beta"] + p["inv0_bias"]                   # (B*N, 128)
    h = h.reshape(B, N, D1_OUT)
    g = (h @ p["equiv1_alpha"]
         + h.mean(1, keepdims=True) @ p["equiv1_beta"] + p["equiv1_bias"])
    g = jnp.maximum(g, 0.0)
    return g.mean(1) @ p["inv1_beta"] + p["inv1_bias"]                # (B, 512)


if __name__ == "__main__":
    key = jax.random.PRNGKey(0)
    ks = jax.random.split(key, 11)

    def init(k, shape, scale=0.1):
        return jax.random.normal(k, shape, jnp.float32) * scale

    params = {
        "equiv0_alpha": init(ks[0], (D0_IN, D0_OUT)),
        "equiv0_beta":  init(ks[1], (D0_IN, D0_OUT)),
        "equiv0_bias":  init(ks[2], (1, D0_OUT)),
        "inv0_beta":    init(ks[3], (D1_IN, D1_OUT)),
        "inv0_bias":    init(ks[4], (1, D1_OUT)),
        "equiv1_alpha": init(ks[5], (D2_IN, D2_OUT)),
        "equiv1_beta":  init(ks[6], (D2_IN, D2_OUT)),
        "equiv1_bias":  init(ks[7], (1, D2_OUT)),
        "inv1_beta":    init(ks[8], (D3_IN, D3_OUT)),
        "inv1_bias":    init(ks[9], (1, D3_OUT)),
    }

    B, N, M = 2, 8, 16
    x = jax.random.normal(ks[10], (B, N, M), jnp.float32)

    out = jax.block_until_ready(deep_table_forward(x, params))
    ref = deep_table_reference(x, params)
    assert out.shape == (B, D3_OUT)
    np.testing.assert_allclose(np.asarray(out), np.asarray(ref), rtol=1e-4, atol=1e-4)
    print("KERNEL_OK")
</pallas_src>

<mosaic_0001>
module attributes {stable_mosaic.version = 11 : i64} {
  func.func @_deep_table_kernel(%arg0: i32, %arg1: memref<8x16xf32, #tpu.memory_space<vmem>>, %arg2: memref<16x1024xf32, #tpu.memory_space<vmem>>, %arg3: memref<1x1024xf32, #tpu.memory_space<vmem>>, %arg4: memref<1024x128xf32, #tpu.memory_space<vmem>>, %arg5: memref<1x128xf32, #tpu.memory_space<vmem>>, %arg6: memref<128x256xf32, #tpu.memory_space<vmem>>, %arg7: memref<128x256xf32, #tpu.memory_space<vmem>>, %arg8: memref<1x256xf32, #tpu.memory_space<vmem>>, %arg9: memref<256x512xf32, #tpu.memory_space<vmem>>, %arg10: memref<1x512xf32, #tpu.memory_space<vmem>>, %arg11: memref<1x8xf32, #tpu.memory_space<vmem>>, %arg12: memref<8x1xf32, #tpu.memory_space<vmem>>, %arg13: memref<1x1x512xf32, #tpu.memory_space<vmem>>) attributes {dimension_semantics = [#tpu.dimension_semantics<parallel>], iteration_bounds = array<i64: 2>, scalar_prefetch = 0 : i64, scratch_operands = 0 : i64, tpu.core_type = #tpu.core_type<tc>, window_params = [{transform_indices = @transform_0, window_bounds = array<i64: 8, 16>}, {pipeline_mode = #tpu.pipeline_mode<synchronous>, transform_indices = @transform_1, window_bounds = array<i64: 16, 1024>}, {pipeline_mode = #tpu.pipeline_mode<synchronous>, transform_indices = @transform_2, window_bounds = array<i64: 1, 1024>}, {pipeline_mode = #tpu.pipeline_mode<synchronous>, transform_indices = @transform_3, window_bounds = array<i64: 1024, 128>}, {pipeline_mode = #tpu.pipeline_mode<synchronous>, transform_indices = @transform_4, window_bounds = array<i64: 1, 128>}, {pipeline_mode = #tpu.pipeline_mode<synchronous>, transform_indices = @transform_5, window_bounds = array<i64: 128, 256>}, {pipeline_mode = #tpu.pipeline_mode<synchronous>, transform_indices = @transform_6, window_bounds = array<i64: 128, 256>}, {pipeline_mode = #tpu.pipeline_mode<synchronous>, transform_indices = @transform_7, window_bounds = array<i64: 1, 256>}, {pipeline_mode = #tpu.pipeline_mode<synchronous>, transform_indices = @transform_8, window_bounds = array<i64: 256, 512>}, {pipeline_mode = #tpu.pipeline_mode<synchronous>, transform_indices = @transform_9, window_bounds = array<i64: 1, 512>}, {pipeline_mode = #tpu.pipeline_mode<synchronous>, transform_indices = @transform_10, window_bounds = array<i64: 1, 8>}, {pipeline_mode = #tpu.pipeline_mode<synchronous>, transform_indices = @transform_11, window_bounds = array<i64: 8, 1>}, {transform_indices = @transform_12, window_bounds = array<i64: 1, 1, 512>}]} {
    %c0 = arith.constant 0 : index
    %c0_0 = arith.constant 0 : index
    %0 = vector.load %arg1[%c0, %c0_0] : memref<8x16xf32, #tpu.memory_space<vmem>>, vector<8x16xf32>
    %c0_1 = arith.constant 0 : index
    %c0_2 = arith.constant 0 : index
    %1 = vector.load %arg2[%c0_1, %c0_2] : memref<16x1024xf32, #tpu.memory_space<vmem>>, vector<16x1024xf32>
    %cst = arith.constant dense<0.000000e+00> : vector<8x1024xf32>
    %2 = tpu.matmul %0, %1, %cst {dimension_numbers = #tpu.dot_dimension_numbers<[1], [0], [0], [1], [0, 0, 1, 1], [], []>} : vector<8x16xf32>, vector<16x1024xf32>, vector<8x1024xf32> -> vector<8x1024xf32>
    %c0_3 = arith.constant 0 : index
    %c0_4 = arith.constant 0 : index
    %3 = vector.load %arg3[%c0_3, %c0_4] : memref<1x1024xf32, #tpu.memory_space<vmem>>, vector<1x1024xf32>
    %4 = vector.broadcast %3 : vector<1x1024xf32> to vector<8x1024xf32>
    %5 = arith.addf %2, %4 : vector<8x1024xf32>
    %cst_5 = arith.constant 0.000000e+00 : f32
    %6 = vector.broadcast %cst_5 : f32 to vector<8x1024xf32>
    %7 = arith.maximumf %5, %6 : vector<8x1024xf32>
    %c0_6 = arith.constant 0 : index
    %c0_7 = arith.constant 0 : index
    %8 = vector.load %arg4[%c0_6, %c0_7] : memref<1024x128xf32, #tpu.memory_space<vmem>>, vector<1024x128xf32>
    %cst_8 = arith.constant dense<0.000000e+00> : vector<8x128xf32>
    %9 = tpu.matmul %7, %8, %cst_8 {dimension_numbers = #tpu.dot_dimension_numbers<[1], [0], [0], [1], [0, 0, 1, 1], [], []>} : vector<8x1024xf32>, vector<1024x128xf32>, vector<8x128xf32> -> vector<8x128xf32>
    %c0_9 = arith.constant 0 : index
    %c0_10 = arith.constant 0 : index
    %10 = vector.load %arg5[%c0_9, %c0_10] : memref<1x128xf32, #tpu.memory_space<vmem>>, vector<1x128xf32>
    %11 = vector.broadcast %10 : vector<1x128xf32> to vector<8x128xf32>
    %12 = arith.addf %9, %11 : vector<8x128xf32>
    %c0_11 = arith.constant 0 : index
    %c0_12 = arith.constant 0 : index
    %13 = vector.load %arg11[%c0_11, %c0_12] : memref<1x8xf32, #tpu.memory_space<vmem>>, vector<1x8xf32>
    %cst_13 = arith.constant dense<0.000000e+00> : vector<1x128xf32>
    %14 = tpu.matmul %13, %12, %cst_13 {dimension_numbers = #tpu.dot_dimension_numbers<[1], [0], [0], [1], [0, 0, 1, 1], [], []>} : vector<1x8xf32>, vector<8x128xf32>, vector<1x128xf32> -> vector<1x128xf32>
    %c0_14 = arith.constant 0 : index
    %c0_15 = arith.constant 0 : index
    %15 = vector.load %arg7[%c0_14, %c0_15] : memref<128x256xf32, #tpu.memory_space<vmem>>, vector<128x256xf32>
    %cst_16 = arith.constant dense<0.000000e+00> : vector<1x256xf32>
    %16 = tpu.matmul %14, %15, %cst_16 {dimension_numbers = #tpu.dot_dimension_numbers<[1], [0], [0], [1], [0, 0, 1, 1], [], []>} : vector<1x128xf32>, vector<128x256xf32>, vector<1x256xf32> -> vector<1x256xf32>
    %c0_17 = arith.constant 0 : index
    %c0_18 = arith.constant 0 : index
    %17 = vector.load %arg8[%c0_17, %c0_18] : memref<1x256xf32, #tpu.memory_space<vmem>>, vector<1x256xf32>
    %18 = arith.addf %16, %17 : vector<1x256xf32>
    %c0_19 = arith.constant 0 : index
    %c0_20 = arith.constant 0 : index
    %19 = vector.load %arg6[%c0_19, %c0_20] : memref<128x256xf32, #tpu.memory_space<vmem>>, vector<128x256xf32>
    %cst_21 = arith.constant dense<0.000000e+00> : vector<8x256xf32>
    %20 = tpu.matmul %12, %19, %cst_21 {dimension_numbers = #tpu.dot_dimension_numbers<[1], [0], [0], [1], [0, 0, 1, 1], [], []>} : vector<8x128xf32>, vector<128x256xf32>, vector<8x256xf32> -> vector<8x256xf32>
    %21 = vector.broadcast %18 : vector<1x256xf32> to vector<8x256xf32>
    %22 = arith.addf %20, %21 : vector<8x256xf32>
    %cst_22 = arith.constant 0.000000e+00 : f32
    %23 = vector.broadcast %cst_22 : f32 to vector<8x256xf32>
    %24 = arith.maximumf %22, %23 : vector<8x256xf32>
    %cst_23 = arith.constant dense<0.000000e+00> : vector<1x256xf32>
    %25 = tpu.matmul %13, %24, %cst_23 {dimension_numbers = #tpu.dot_dimension_numbers<[1], [0], [0], [1], [0, 0, 1, 1], [], []>} : vector<1x8xf32>, vector<8x256xf32>, vector<1x256xf32> -> vector<1x256xf32>
    %c0_24 = arith.constant 0 : index
    %c0_25 = arith.constant 0 : index
    %26 = vector.load %arg9[%c0_24, %c0_25] : memref<256x512xf32, #tpu.memory_space<vmem>>, vector<256x512xf32>
    %cst_26 = arith.constant dense<0.000000e+00> : vector<1x512xf32>
    %27 = tpu.matmul %25, %26, %cst_26 {dimension_numbers = #tpu.dot_dimension_numbers<[1], [0], [0], [1], [0, 0, 1, 1], [], []>} : vector<1x256xf32>, vector<256x512xf32>, vector<1x512xf32> -> vector<1x512xf32>
    %c0_27 = arith.constant 0 : index
    %c0_28 = arith.constant 0 : index
    %28 = vector.load %arg10[%c0_27, %c0_28] : memref<1x512xf32, #tpu.memory_space<vmem>>, vector<1x512xf32>
    %29 = arith.addf %27, %28 : vector<1x512xf32>
    %c0_29 = arith.constant 0 : index
    %c0_30 = arith.constant 0 : index
    %c0_31 = arith.constant 0 : index
    %30 = vector.load %arg13[%c0_29, %c0_30, %c0_31] : memref<1x1x512xf32, #tpu.memory_space<vmem>>, vector<1x1x512xf32>
    %31 = vector.shape_cast %30 : vector<1x1x512xf32> to vector<1x512xf32>
    %32 = vector.shape_cast %29 : vector<1x512xf32> to vector<1x1x512xf32>
    tpu.vector_store %arg13[%c0_29, %c0_30, %c0_31], %32 {strides = array<i32>} : memref<1x1x512xf32, #tpu.memory_space<vmem>>, vector<1x1x512xf32>,
    return
  }
  func.func @transform_0(%arg0: i32) -> (i32, i32) {
    %c0_i32 = arith.constant 0 : i32
    %c0_i32_0 = arith.constant 0 : i32
    return %arg0, %c0_i32 : i32, i32
  }
  func.func @transform_1(%arg0: i32) -> (i32, i32) {
    %c0_i32 = arith.constant 0 : i32
    %c0_i32_0 = arith.constant 0 : i32
    %c0_i32_1 = arith.constant 0 : i32
    return %c0_i32, %c0_i32_0 : i32, i32
  }
  func.func @transform_2(%arg0: i32) -> (i32, i32) {
    %c0_i32 = arith.constant 0 : i32
    %c0_i32_0 = arith.constant 0 : i32
    %c0_i32_1 = arith.constant 0 : i32
    return %c0_i32, %c0_i32_0 : i32, i32
  }
  func.func @transform_3(%arg0: i32) -> (i32, i32) {
    %c0_i32 = arith.constant 0 : i32
    %c0_i32_0 = arith.constant 0 : i32
    %c0_i32_1 = arith.constant 0 : i32
    return %c0_i32, %c0_i32_0 : i32, i32
  }
  func.func @transform_4(%arg0: i32) -> (i32, i32) {
    %c0_i32 = arith.constant 0 : i32
    %c0_i32_0 = arith.constant 0 : i32
    %c0_i32_1 = arith.constant 0 : i32
    return %c0_i32, %c0_i32_0 : i32, i32
  }
  func.func @transform_5(%arg0: i32) -> (i32, i32) {
    %c0_i32 = arith.constant 0 : i32
    %c0_i32_0 = arith.constant 0 : i32
    %c0_i32_1 = arith.constant 0 : i32
    return %c0_i32, %c0_i32_0 : i32, i32
  }
  func.func @transform_6(%arg0: i32) -> (i32, i32) {
    %c0_i32 = arith.constant 0 : i32
    %c0_i32_0 = arith.constant 0 : i32
    %c0_i32_1 = arith.constant 0 : i32
    return %c0_i32, %c0_i32_0 : i32, i32
  }
  func.func @transform_7(%arg0: i32) -> (i32, i32) {
    %c0_i32 = arith.constant 0 : i32
    %c0_i32_0 = arith.constant 0 : i32
    %c0_i32_1 = arith.constant 0 : i32
    return %c0_i32, %c0_i32_0 : i32, i32
  }
  func.func @transform_8(%arg0: i32) -> (i32, i32) {
    %c0_i32 = arith.constant 0 : i32
    %c0_i32_0 = arith.constant 0 : i32
    %c0_i32_1 = arith.constant 0 : i32
    return %c0_i32, %c0_i32_0 : i32, i32
  }
  func.func @transform_9(%arg0: i32) -> (i32, i32) {
    %c0_i32 = arith.constant 0 : i32
    %c0_i32_0 = arith.constant 0 : i32
    %c0_i32_1 = arith.constant 0 : i32
    return %c0_i32, %c0_i32_0 : i32, i32
  }
  func.func @transform_10(%arg0: i32) -> (i32, i32) {
    %c0_i32 = arith.constant 0 : i32
    %c0_i32_0 = arith.constant 0 : i32
    %c0_i32_1 = arith.constant 0 : i32
    return %c0_i32, %c0_i32_0 : i32, i32
  }
  func.func @transform_11(%arg0: i32) -> (i32, i32) {
    %c0_i32 = arith.constant 0 : i32
    %c0_i32_0 = arith.constant 0 : i32
    %c0_i32_1 = arith.constant 0 : i32
    return %c0_i32, %c0_i32_0 : i32, i32
  }
  func.func @transform_12(%arg0: i32) -> (i32, i32, i32) {
    %c0_i32 = arith.constant 0 : i32
    %c0_i32_0 = arith.constant 0 : i32
    %c0_i32_1 = arith.constant 0 : i32
    return %arg0, %c0_i32, %c0_i32_0 : i32, i32, i32
  }
}

</mosaic_0001>

<llo_original>
// kernel: tpu_custom_call.1
$region0: #{tpu_custom_call.1}
  #allocation0 [shape = 'u32[]', space=smem, size = 0x4, offset = 0x4, fixed_abs, tag = 'smem constant byte address 0x4 - core index']
  #allocation1 [shape = 'u32[144,128]{1,0:T(1,128)}', space=vmem, size = 0x12000, scoped, tag = 'internal scratch']
  %s0 = inlined_call_operand.hbm [shape: f32[16,16], index: 0, kind: input, shape index: {}]
  %s1 = inlined_call_operand.hbm [shape: f32[16,1024], index: 1, kind: input, shape index: {}]
  %s2 = inlined_call_operand.vmem [shape: f32[1,1024], index: 2, kind: input, shape index: {}]
  %s3 = inlined_call_operand.hbm [shape: f32[1024,128], index: 3, kind: input, shape index: {}]
  %s4 = inlined_call_operand.vmem [shape: f32[1,128], index: 4, kind: input, shape index: {}]
  %s5 = inlined_call_operand.hbm [shape: f32[128,256], index: 5, kind: input, shape index: {}]
  %s6 = inlined_call_operand.hbm [shape: f32[128,256], index: 6, kind: input, shape index: {}]
  %s7 = inlined_call_operand.vmem [shape: f32[1,256], index: 7, kind: input, shape index: {}]
  %s8 = inlined_call_operand.hbm [shape: f32[256,512], index: 8, kind: input, shape index: {}]
  %s9 = inlined_call_operand.vmem [shape: f32[1,512], index: 9, kind: input, shape index: {}]
  %s10 = inlined_call_operand.vmem [shape: f32[1,8], index: 10, kind: input, shape index: {}]
  %s11 = inlined_call_operand.vmem [shape: f32[8,1], index: 11, kind: input, shape index: {}]
  %s12 = inlined_call_operand.hbm [shape: f32[2,1,512], index: 12, kind: output, shape index: {}]
  %s13 = sld [smem:[#allocation0]]
  $region105: #{tpu_custom_call.1} parent=0
    _
  %s15 = ssub.s32 1, %s13
  %s16 = scalar_select 0, %s15, %s13
  $region1: #{tpu_custom_call.1} parent=0
    #allocation2 [shape = 'u8[8192]{0}', space=vmem, size = 0x2000, scoped, tag = 'input window, operand 0']
    #allocation3 [shape = 's32[2]{0}', space=sflag, size = 0x8, scoped, tag = 'scoped memory for tpu_custom_call.1']
    #allocation4 [shape = 's32[2]{0}', space=sflag, size = 0x8, scoped, tag = 'scoped memory for tpu_custom_call.1']
    #allocation5 [shape = 'u8[65536]{0}', space=vmem, size = 0x10000, scoped, tag = 'input window, operand 1, single buffered']
    #allocation6 [shape = 's32[1]{0}', space=sflag, size = 0x4, scoped, tag = 'scoped memory for tpu_custom_call.1']
    #allocation7 [shape = 'u8[524288]{0}', space=vmem, size = 0x80000, scoped, tag = 'input window, operand 3, single buffered']
    #allocation8 [shape = 'u8[131072]{0}', space=vmem, size = 0x20000, scoped, tag = 'input window, operand 5, single buffered']
    #allocation9 [shape = 's32[1]{0}', space=sflag, size = 0x4, scoped, tag = 'scoped memory for tpu_custom_call.1']
    #allocation10 [shape = 'u8[131072]{0}', space=vmem, size = 0x20000, scoped, tag = 'input window, operand 6, single buffered']
    #allocation11 [shape = 'u8[524288]{0}', space=vmem, size = 0x80000, scoped, tag = 'input window, operand 8, single buffered']
    #allocation12 [shape = 's32[1]{0}', space=sflag, size = 0x4, scoped, tag = 'scoped memory for tpu_custom_call.1']
    #allocation13 [shape = 'u8[4096]{0}', space=vmem, size = 0x1000, scoped, tag = 'output window, operand 0']
    %17 = vsyncpa [#allocation3], 0
    %s18 = scalar_lea.sflag [#allocation3], 1
    %19 = vsyncpa %s18, 0
    %20 = vsyncpa [#allocation6], 0
    %21 = vsyncpa [#allocation9], 0
    %22 = vsyncpa [#allocation12], 0
    %23 = vsyncpa [#allocation4], 0
    %s24 = scalar_lea.sflag [#allocation4], 1
    %25 = vsyncpa %s24, 0
    loop: start=0, step=1, limit=4
    $region2: #{tpu_custom_call.1} parent=1 // loop_pre_header
      _
    $region3: #{tpu_custom_call.1} parent=1 // loop_header
      %s27 = sphi 0, %s31
      %p28 = scmp.ge.s32.totalorder %s27, 4
      %s37 = sphi 0, %s39
      %s40 = sphi 0, %s37
      %s41 = sphi 0, %s40
      %s57 = sphi 0, %s41
      %s61 = sphi 0, %s61
      %s63 = sphi 0, %s61
      %s64 = sphi 0, %s63
      %s78 = sphi 0, %s64
      %s82 = sphi 0, %s82
      %s84 = sphi 0, %s82
      %s85 = sphi 0, %s84
      %s99 = sphi 0, %s85
      %s103 = sphi 0, %s103
      %s105 = sphi 0, %s103
      %s106 = sphi 0, %s105
      %s120 = sphi 0, %s106
      %s124 = sphi 0, %s124
      %s126 = sphi 0, %s124
      %s127 = sphi 0, %s126
      %s141 = sphi 0, %s127
      %s145 = sphi 0, %s145
      %s147 = sphi 0, %s145
      %s148 = sphi 0, %s147
      %s162 = sphi 0, %s148
      %s166 = sphi 0, %s166
      %s168 = sphi 0, %s166
      %s169 = sphi 0, %s168
      %s183 = sphi 0, %s169
      %s187 = sphi 0, %s187
      %s189 = sphi 0, %s187
      %s190 = sphi 0, %s189
      %s204 = sphi 0, %s190
      %s208 = sphi 0, %s208
      %s210 = sphi 0, %s208
      %s211 = sphi 0, %s210
      %s225 = sphi 0, %s211
      %s229 = sphi 0, %s229
      %s231 = sphi 0, %s229
      %s232 = sphi 0, %s231
      %s246 = sphi 0, %s232
      %s250 = sphi 0, %s250
      %s252 = sphi 0, %s250
      %s253 = sphi 0, %s252
      %s267 = sphi 0, %s253
      %s271 = sphi 0, %s271
      %s273 = sphi 0, %s271
      %s274 = sphi 0, %s273
      %s288 = sphi 0, %s274
      %s294 = sphi 0, %s296
      %s297 = sphi 0, %s294
      %s298 = sphi 0, %s297
      %s314 = sphi 0, %s298
    $region4: #{tpu_custom_call.1} parent=1 // loop_header_branch
      %30 = sbr.rel (%p28) target = $region8
    $region5: #{tpu_custom_call.1} parent=1 // loop_body
      %s32 = ssub.s32 %s27, 1
      %s33 = ssub.s32 %s27, 2
      %s34 = sadd.s32 %s27, 1
      %s35 = ssub.s32 %s27, %s34
      %p36 = scmp.eq.s32.totalorder %s35, 0
      %s38 = sadd.s32 %s37, 1
      %s39 = scalar_select %p36, %s37, %s38
      %p42 = pneg %p36
      %p43 = scmp.eq.s32.totalorder %s27, 1
      %p44 = por %p42, %p43
      %p45 = scmp.ne.s32.totalorder %s37, %s40
      %p46 = scmp.eq.s32.totalorder %s27, 0
      %p47 = por %p45, %p46
      %p48 = scmp.ne.s32.totalorder %s37, %s40
      %p49 = scmp.eq.s32.totalorder %s32, 1
      %p50 = por %p48, %p49
      %p51 = scmp.ne.s32.totalorder %s40, %s41
      %p52 = scmp.eq.s32.totalorder %s32, 0
      %p53 = por %p51, %p52
      %p54 = scmp.ne.s32.totalorder %s40, %s41
      %p55 = scmp.eq.s32.totalorder %s33, 1
      %p56 = por %p54, %p55
      %p58 = scmp.ne.s32.totalorder %s41, %s57
      %p59 = scmp.eq.s32.totalorder %s33, 0
      %p60 = por %p58, %p59
      %s62 = sadd.s32 %s61, 1
      %p65 = scmp.eq.s32.totalorder %s27, 1
      %p66 = scmp.ne.s32.totalorder %s61, %s63
      %p67 = scmp.eq.s32.totalorder %s27, 0
      %p68 = por %p66, %p67
      %p69 = scmp.ne.s32.totalorder %s61, %s63
      %p70 = scmp.eq.s32.totalorder %s32, 1
      %p71 = por %p69, %p70
      %p72 = scmp.ne.s32.totalorder %s63, %s64
      %p73 = scmp.eq.s32.totalorder %s32, 0
      %p74 = por %p72, %p73
      %p75 = scmp.ne.s32.totalorder %s63, %s64
      %p76 = scmp.eq.s32.totalorder %s33, 1
      %p77 = por %p75, %p76
      %p79 = scmp.ne.s32.totalorder %s64, %s78
      %p80 = scmp.eq.s32.totalorder %s33, 0
      %p81 = por %p79, %p80
      %s83 = sadd.s32 %s82, 1
      %p86 = scmp.eq.s32.totalorder %s27, 1
      %p87 = scmp.ne.s32.totalorder %s82, %s84
      %p88 = scmp.eq.s32.totalorder %s27, 0
      %p89 = por %p87, %p88
      %p90 = scmp.ne.s32.totalorder %s82, %s84
      %p91 = scmp.eq.s32.totalorder %s32, 1
      %p92 = por %p90, %p91
      %p93 = scmp.ne.s32.totalorder %s84, %s85
      %p94 = scmp.eq.s32.totalorder %s32, 0
      %p95 = por %p93, %p94
      %p96 = scmp.ne.s32.totalorder %s84, %s85
      %p97 = scmp.eq.s32.totalorder %s33, 1
      %p98 = por %p96, %p97
      %p100 = scmp.ne.s32.totalorder %s85, %s99
      %p101 = scmp.eq.s32.totalorder %s33, 0
      %p102 = por %p100, %p101
      %s104 = sadd.s32 %s103, 1
      %p107 = scmp.eq.s32.totalorder %s27, 1
      %p108 = scmp.ne.s32.totalorder %s103, %s105
      %p109 = scmp.eq.s32.totalorder %s27, 0
      %p110 = por %p108, %p109
      %p111 = scmp.ne.s32.totalorder %s103, %s105
      %p112 = scmp.eq.s32.totalorder %s32, 1
      %p113 = por %p111, %p112
      %p114 = scmp.ne.s32.totalorder %s105, %s106
      %p115 = scmp.eq.s32.totalorder %s32, 0
      %p116 = por %p114, %p115
      %p117 = scmp.ne.s32.totalorder %s105, %s106
      %p118 = scmp.eq.s32.totalorder %s33, 1
      %p119 = por %p117, %p118
      %p121 = scmp.ne.s32.totalorder %s106, %s120
      %p122 = scmp.eq.s32.totalorder %s33, 0
      %p123 = por %p121, %p122
      %s125 = sadd.s32 %s124, 1
      %p128 = scmp.eq.s32.totalorder %s27, 1
      %p129 = scmp.ne.s32.totalorder %s124, %s126
      %p130 = scmp.eq.s32.totalorder %s27, 0
      %p131 = por %p129, %p130
      %p132 = scmp.ne.s32.totalorder %s124, %s126
      %p133 = scmp.eq.s32.totalorder %s32, 1
      %p134 = por %p132, %p133
      %p135 = scmp.ne.s32.totalorder %s126, %s127
      %p136 = scmp.eq.s32.totalorder %s32, 0
      %p137 = por %p135, %p136
      %p138 = scmp.ne.s32.totalorder %s126, %s127
      %p139 = scmp.eq.s32.totalorder %s33, 1
      %p140 = por %p138, %p139
      %p142 = scmp.ne.s32.totalorder %s127, %s141
      %p143 = scmp.eq.s32.totalorder %s33, 0
      %p144 = por %p142, %p143
      %s146 = sadd.s32 %s145, 1
      %p149 = scmp.eq.s32.totalorder %s27, 1
      %p150 = scmp.ne.s32.totalorder %s145, %s147
      %p151 = scmp.eq.s32.totalorder %s27, 0
      %p152 = por %p150, %p151
      %p153 = scmp.ne.s32.totalorder %s145, %s147
      %p154 = scmp.eq.s32.totalorder %s32, 1
      %p155 = por %p153, %p154
      %p156 = scmp.ne.s32.totalorder %s147, %s148
      %p157 = scmp.eq.s32.totalorder %s32, 0
      %p158 = por %p156, %p157
      %p159 = scmp.ne.s32.totalorder %s147, %s148
      %p160 = scmp.eq.s32.totalorder %s33, 1
      %p161 = por %p159, %p160
      %p163 = scmp.ne.s32.totalorder %s148, %s162
      %p164 = scmp.eq.s32.totalorder %s33, 0
      %p165 = por %p163, %p164
      %s167 = sadd.s32 %s166, 1
      %p170 = scmp.eq.s32.totalorder %s27, 1
      %p171 = scmp.ne.s32.totalorder %s166, %s168
      %p172 = scmp.eq.s32.totalorder %s27, 0
      %p173 = por %p171, %p172
      %p174 = scmp.ne.s32.totalorder %s166, %s168
      %p175 = scmp.eq.s32.totalorder %s32, 1
      %p176 = por %p174, %p175
      %p177 = scmp.ne.s32.totalorder %s168, %s169
      %p178 = scmp.eq.s32.totalorder %s32, 0
      %p179 = por %p177, %p178
      %p180 = scmp.ne.s32.totalorder %s168, %s169
      %p181 = scmp.eq.s32.totalorder %s33, 1
      %p182 = por %p180, %p181
      %p184 = scmp.ne.s32.totalorder %s169, %s183
      %p185 = scmp.eq.s32.totalorder %s33, 0
      %p186 = por %p184, %p185
      %s188 = sadd.s32 %s187, 1
      %p191 = scmp.eq.s32.totalorder %s27, 1
      %p192 = scmp.ne.s32.totalorder %s187, %s189
      %p193 = scmp.eq.s32.totalorder %s27, 0
      %p194 = por %p192, %p193
      %p195 = scmp.ne.s32.totalorder %s187, %s189
      %p196 = scmp.eq.s32.totalorder %s32, 1
      %p197 = por %p195, %p196
      %p198 = scmp.ne.s32.totalorder %s189, %s190
      %p199 = scmp.eq.s32.totalorder %s32, 0
      %p200 = por %p198, %p199
      %p201 = scmp.ne.s32.totalorder %s189, %s190
      %p202 = scmp.eq.s32.totalorder %s33, 1
      %p203 = por %p201, %p202
      %p205 = scmp.ne.s32.totalorder %s190, %s204
      %p206 = scmp.eq.s32.totalorder %s33, 0
      %p207 = por %p205, %p206
      %s209 = sadd.s32 %s208, 1
      %p212 = scmp.eq.s32.totalorder %s27, 1
      %p213 = scmp.ne.s32.totalorder %s208, %s210
      %p214 = scmp.eq.s32.totalorder %s27, 0
      %p215 = por %p213, %p214
      %p216 = scmp.ne.s32.totalorder %s208, %s210
      %p217 = scmp.eq.s32.totalorder %s32, 1
      %p218 = por %p216, %p217
      %p219 = scmp.ne.s32.totalorder %s210, %s211
      %p220 = scmp.eq.s32.totalorder %s32, 0
      %p221 = por %p219, %p220
      %p222 = scmp.ne.s32.totalorder %s210, %s211
      %p223 = scmp.eq.s32.totalorder %s33, 1
      %p224 = por %p222, %p223
      %p226 = scmp.ne.s32.totalorder %s211, %s225
      %p227 = scmp.eq.s32.totalorder %s33, 0
      %p228 = por %p226, %p227
      %s230 = sadd.s32 %s229, 1
      %p233 = scmp.eq.s32.totalorder %s27, 1
      %p234 = scmp.ne.s32.totalorder %s229, %s231
      %p235 = scmp.eq.s32.totalorder %s27, 0
      %p236 = por %p234, %p235
      %p237 = scmp.ne.s32.totalorder %s229, %s231
      %p238 = scmp.eq.s32.totalorder %s32, 1
      %p239 = por %p237, %p238
      %p240 = scmp.ne.s32.totalorder %s231, %s232
      %p241 = scmp.eq.s32.totalorder %s32, 0
      %p242 = por %p240, %p241
      %p243 = scmp.ne.s32.totalorder %s231, %s232
      %p244 = scmp.eq.s32.totalorder %s33, 1
      %p245 = por %p243, %p244
      %p247 = scmp.ne.s32.totalorder %s232, %s246
      %p248 = scmp.eq.s32.totalorder %s33, 0
      %p249 = por %p247, %p248
      %s251 = sadd.s32 %s250, 1
      %p254 = scmp.eq.s32.totalorder %s27, 1
      %p255 = scmp.ne.s32.totalorder %s250, %s252
      %p256 = scmp.eq.s32.totalorder %s27, 0
      %p257 = por %p255, %p256
      %p258 = scmp.ne.s32.totalorder %s250, %s252
      %p259 = scmp.eq.s32.totalorder %s32, 1
      %p260 = por %p258, %p259
      %p261 = scmp.ne.s32.totalorder %s252, %s253
      %p262 = scmp.eq.s32.totalorder %s32, 0
      %p263 = por %p261, %p262
      %p264 = scmp.ne.s32.totalorder %s252, %s253
      %p265 = scmp.eq.s32.totalorder %s33, 1
      %p266 = por %p264, %p265
      %p268 = scmp.ne.s32.totalorder %s253, %s267
      %p269 = scmp.eq.s32.totalorder %s33, 0
      %p270 = por %p268, %p269
      %s272 = sadd.s32 %s271, 1
      %p275 = scmp.eq.s32.totalorder %s27, 1
      %p276 = scmp.ne.s32.totalorder %s271, %s273
      %p277 = scmp.eq.s32.totalorder %s27, 0
      %p278 = por %p276, %p277
      %p279 = scmp.ne.s32.totalorder %s271, %s273
      %p280 = scmp.eq.s32.totalorder %s32, 1
      %p281 = por %p279, %p280
      %p282 = scmp.ne.s32.totalorder %s273, %s274
      %p283 = scmp.eq.s32.totalorder %s32, 0
      %p284 = por %p282, %p283
      %p285 = scmp.ne.s32.totalorder %s273, %s274
      %p286 = scmp.eq.s32.totalorder %s33, 1
      %p287 = por %p285, %p286
      %p289 = scmp.ne.s32.totalorder %s274, %s288
      %p290 = scmp.eq.s32.totalorder %s33, 0
      %p291 = por %p289, %p290
      %s292 = ssub.s32 %s27, %s34
      %p293 = scmp.eq.s32.totalorder %s292, 0
      %s295 = sadd.s32 %s294, 1
      %s296 = scalar_select %p293, %s294, %s295
      %p299 = pneg %p293
      %p300 = scmp.eq.s32.totalorder %s27, 1
      %p301 = por %p299, %p300
      %p302 = scmp.ne.s32.totalorder %s294, %s297
      %p303 = scmp.eq.s32.totalorder %s27, 0
      %p304 = por %p302, %p303
      %p305 = scmp.ne.s32.totalorder %s294, %s297
      %p306 = scmp.eq.s32.totalorder %s32, 1
      %p307 = por %p305, %p306
      %p308 = scmp.ne.s32.totalorder %s297, %s298
      %p309 = scmp.eq.s32.totalorder %s32, 0
      %p310 = por %p308, %p309
      %p311 = scmp.ne.s32.totalorder %s297, %s298
      %p312 = scmp.eq.s32.totalorder %s33, 1
      %p313 = por %p311, %p312
      %p315 = scmp.ne.s32.totalorder %s298, %s314
      %p316 = scmp.eq.s32.totalorder %s33, 0
      %p317 = por %p315, %p316
      %p318 = scmp.le.s32.totalorder 1, %s27
      %p319 = scmp.lt.s32.totalorder %s27, 3
      %p320 = pnand %p318, %p319
      %p321 = pneg %p320
      // Predicated region
      $region9: #{tpu_custom_call.1} parent=5 // pred_check
        _
      $region10: #{tpu_custom_call.1} parent=5 // pred_check_branch
        %323 = sbr.rel (%p320) target = $region12
      $region11: #{tpu_custom_call.1} parent=5 // pred_region
        %s324 = ssub.s32 %s27, 1
        // Predicated region
        $region13: #{tpu_custom_call.1} parent=11 // pred_check
          %p325 = pneg %p74
        $region14: #{tpu_custom_call.1} parent=11 // pred_check_branch
          %327 = sbr.rel (%p325) target = $region16
        $region15: #{tpu_custom_call.1} parent=11 // pred_region
          %s329 = ssub.s32 2048, 2048
          %330 = vsyncadd [#allocation6], %s329
          %s331 = sshll.u32 [#allocation5], 4
          %s332 = int_to_ptr.vmem [resolvable:$true] %s331
          %337 = dma.hbm_to_vmem [thread:$0]  %s1, 2048, %s332, [#allocation6], 1024, 1024, 64
        $region16: #{tpu_custom_call.1} parent=11 // pred_fallthru
          _
        // Predicated region
        $region17: #{tpu_custom_call.1} parent=11 // pred_check
          %p338 = pneg %p95
        $region18: #{tpu_custom_call.1} parent=11 // pred_check_branch
          %340 = sbr.rel (%p338) target = $region20
        $region19: #{tpu_custom_call.1} parent=11 // pred_region
          _
        $region20: #{tpu_custom_call.1} parent=11 // pred_fallthru
          _
        // Predicated region
        $region21: #{tpu_custom_call.1} parent=11 // pred_check
          %p341 = pneg %p116
        $region22: #{tpu_custom_call.1} parent=11 // pred_check_branch
          %343 = sbr.rel (%p341) target = $region24
        $region23: #{tpu_custom_call.1} parent=11 // pred_region
          %s345 = ssub.s32 16384, 16384
          %346 = vsyncadd [#allocation6], %s345
          %s347 = sshll.u32 [#allocation7], 4
          %s348 = int_to_ptr.vmem [resolvable:$true] %s347
          %353 = dma.hbm_to_vmem [thread:$0]  %s3, 16384, %s348, [#allocation6], 128, 128, 8
        $region24: #{tpu_custom_call.1} parent=11 // pred_fallthru
          _
        // Predicated region
        $region25: #{tpu_custom_call.1} parent=11 // pred_check
          %p354 = pneg %p137
        $region26: #{tpu_custom_call.1} parent=11 // pred_check_branch
          %356 = sbr.rel (%p354) target = $region28
        $region27: #{tpu_custom_call.1} parent=11 // pred_region
          _
        $region28: #{tpu_custom_call.1} parent=11 // pred_fallthru
          _
        // Predicated region
        $region29: #{tpu_custom_call.1} parent=11 // pred_check
          %p357 = pneg %p158
        $region30: #{tpu_custom_call.1} parent=11 // pred_check_branch
          %359 = sbr.rel (%p357) target = $region32
        $region31: #{tpu_custom_call.1} parent=11 // pred_region
          %s361 = ssub.s32 4096, 4096
          %362 = vsyncadd [#allocation9], %s361
          %s363 = sshll.u32 [#allocation8], 4
          %s364 = int_to_ptr.vmem [resolvable:$true] %s363
          %369 = dma.hbm_to_vmem [thread:$0]  %s5, 4096, %s364, [#allocation9], 256, 256, 16
        $region32: #{tpu_custom_call.1} parent=11 // pred_fallthru
          _
        // Predicated region
        $region33: #{tpu_custom_call.1} parent=11 // pred_check
          %p370 = pneg %p179
        $region34: #{tpu_custom_call.1} parent=11 // pred_check_branch
          %372 = sbr.rel (%p370) target = $region36
        $region35: #{tpu_custom_call.1} parent=11 // pred_region
          %s374 = ssub.s32 4096, 4096
          %375 = vsyncadd [#allocation9], %s374
          %s376 = sshll.u32 [#allocation10], 4
          %s377 = int_to_ptr.vmem [resolvable:$true] %s376
          %382 = dma.hbm_to_vmem [thread:$0]  %s6, 4096, %s377, [#allocation9], 256, 256, 16
        $region36: #{tpu_custom_call.1} parent=11 // pred_fallthru
          _
        // Predicated region
        $region37: #{tpu_custom_call.1} parent=11 // pred_check
          %p383 = pneg %p200
        $region38: #{tpu_custom_call.1} parent=11 // pred_check_branch
          %385 = sbr.rel (%p383) target = $region40
        $region39: #{tpu_custom_call.1} parent=11 // pred_region
          _
        $region40: #{tpu_custom_call.1} parent=11 // pred_fallthru
          _
        // Predicated region
        $region41: #{tpu_custom_call.1} parent=11 // pred_check
          %p386 = pneg %p221
        $region42: #{tpu_custom_call.1} parent=11 // pred_check_branch
          %388 = sbr.rel (%p386) target = $region44
        $region43: #{tpu_custom_call.1} parent=11 // pred_region
          %s390 = ssub.s32 16384, 16384
          %391 = vsyncadd [#allocation12], %s390
          %s392 = sshll.u32 [#allocation11], 4
          %s393 = int_to_ptr.vmem [resolvable:$true] %s392
          %398 = dma.hbm_to_vmem [thread:$0]  %s8, 16384, %s393, [#allocation12], 512, 512, 32
        $region44: #{tpu_custom_call.1} parent=11 // pred_fallthru
          _
        // Predicated region
        $region45: #{tpu_custom_call.1} parent=11 // pred_check
          %p399 = pneg %p242
        $region46: #{tpu_custom_call.1} parent=11 // pred_check_branch
          %401 = sbr.rel (%p399) target = $region48
        $region47: #{tpu_custom_call.1} parent=11 // pred_region
          _
        $region48: #{tpu_custom_call.1} parent=11 // pred_fallthru
          _
        // Predicated region
        $region49: #{tpu_custom_call.1} parent=11 // pred_check
          %p402 = pneg %p263
        $region50: #{tpu_custom_call.1} parent=11 // pred_check_branch
          %404 = sbr.rel (%p402) target = $region52
        $region51: #{tpu_custom_call.1} parent=11 // pred_region
          _
        $region52: #{tpu_custom_call.1} parent=11 // pred_fallthru
          _
        // Predicated region
        $region53: #{tpu_custom_call.1} parent=11 // pred_check
          %p405 = pneg %p284
        $region54: #{tpu_custom_call.1} parent=11 // pred_check_branch
          %407 = sbr.rel (%p405) target = $region56
        $region55: #{tpu_custom_call.1} parent=11 // pred_region
          _
        $region56: #{tpu_custom_call.1} parent=11 // pred_fallthru
          _
      $region12: #{tpu_custom_call.1} parent=5 // pred_fallthru
        _
      %p408 = scmp.lt.s32.totalorder %s27, 2
      // Predicated region
      $region57: #{tpu_custom_call.1} parent=5 // pred_check
        %p409 = pneg %p408
      $region58: #{tpu_custom_call.1} parent=5 // pred_check_branch
        %411 = sbr.rel (%p409) target = $region60
      $region59: #{tpu_custom_call.1} parent=5 // pred_region
        // Predicated region
        $region61: #{tpu_custom_call.1} parent=59 // pred_check
          %p412 = pneg %p47
        $region62: #{tpu_custom_call.1} parent=59 // pred_check_branch
          %414 = sbr.rel (%p412) target = $region64
        $region63: #{tpu_custom_call.1} parent=59 // pred_region
          %s415 = sand.u32 %s37, 1
          %s416 = scalar_lea.sflag [#allocation3], %s415
          %s417 = sand.u32 %s37, 1
          %s418 = smul.addr %s417, 8
          %s419 = scalar_lea.vmem [#allocation2], %s418
          %s421 = ssub.s32 128, 128
          %422 = vsyncadd %s416, %s421
          %s423 = smul.addr %s27, 128
          %s424 = scalar_lea.hbm %s0, %s423
          %s426 = sshll.u32 %s419, 4
          %s427 = int_to_ptr.vmem [resolvable:$true] %s426
          %429 = dma.hbm_to_vmem [thread:$0]  %s424, 128, %s427, %s416
        $region64: #{tpu_custom_call.1} parent=59 // pred_fallthru
          _
      $region60: #{tpu_custom_call.1} parent=5 // pred_fallthru
        _
      %p430 = scmp.le.s32.totalorder 1, %s27
      %p431 = scmp.lt.s32.totalorder %s27, 3
      %p432 = pnand %p430, %p431
      %p433 = pneg %p432
      // Predicated region
      $region65: #{tpu_custom_call.1} parent=5 // pred_check
        _
      $region66: #{tpu_custom_call.1} parent=5 // pred_check_branch
        %435 = sbr.rel (%p432) target = $region68
      $region67: #{tpu_custom_call.1} parent=5 // pred_region
        %s436 = ssub.s32 %s27, 1
        %s437 = sand.u32 %s40, 1
        %s438 = scalar_lea.sflag [#allocation3], %s437
        %s439 = sand.u32 %s40, 1
        %s440 = smul.addr %s439, 8
        %s441 = scalar_lea.vmem [#allocation2], %s440
        // Predicated region
        $region69: #{tpu_custom_call.1} parent=67 // pred_check
          %p442 = pneg %p53
        $region70: #{tpu_custom_call.1} parent=67 // pred_check_branch
          %444 = sbr.rel (%p442) target = $region72
        $region71: #{tpu_custom_call.1} parent=67 // pred_region
          %445 = dma.done %s438, 128
        $region72: #{tpu_custom_call.1} parent=67 // pred_fallthru
          _
        // Predicated region
        $region73: #{tpu_custom_call.1} parent=67 // pred_check
          %p446 = pneg %p74
        $region74: #{tpu_custom_call.1} parent=67 // pred_check_branch
          %448 = sbr.rel (%p446) target = $region76
        $region75: #{tpu_custom_call.1} parent=67 // pred_region
          %449 = dma.done [#allocation6], 2048
        $region76: #{tpu_custom_call.1} parent=67 // pred_fallthru
          _
        // Predicated region
        $region77: #{tpu_custom_call.1} parent=67 // pred_check
          %p450 = pneg %p116
        $region78: #{tpu_custom_call.1} parent=67 // pred_check_branch
          %452 = sbr.rel (%p450) target = $region80
        $region79: #{tpu_custom_call.1} parent=67 // pred_region
          %453 = dma.done [#allocation6], 16384
        $region80: #{tpu_custom_call.1} parent=67 // pred_fallthru
          _
        // Predicated region
        $region81: #{tpu_custom_call.1} parent=67 // pred_check
          %p454 = pneg %p158
        $region82: #{tpu_custom_call.1} parent=67 // pred_check_branch
          %456 = sbr.rel (%p454) target = $region84
        $region83: #{tpu_custom_call.1} parent=67 // pred_region
          %457 = dma.done [#allocation9], 4096
        $region84: #{tpu_custom_call.1} parent=67 // pred_fallthru
          _
        // Predicated region
        $region85: #{tpu_custom_call.1} parent=67 // pred_check
          %p458 = pneg %p179
        $region86: #{tpu_custom_call.1} parent=67 // pred_check_branch
          %460 = sbr.rel (%p458) target = $region88
        $region87: #{tpu_custom_call.1} parent=67 // pred_region
          %461 = dma.done [#allocation9], 4096
        $region88: #{tpu_custom_call.1} parent=67 // pred_fallthru
          _
        // Predicated region
        $region89: #{tpu_custom_call.1} parent=67 // pred_check
          %p462 = pneg %p221
        $region90: #{tpu_custom_call.1} parent=67 // pred_check_branch
          %464 = sbr.rel (%p462) target = $region92
        $region91: #{tpu_custom_call.1} parent=67 // pred_region
          %465 = dma.done [#allocation12], 16384
        $region92: #{tpu_custom_call.1} parent=67 // pred_fallthru
          _
        %s466 = sand.u32 %s40, 1
        %s467 = scalar_lea.sflag [#allocation3], %s466
        %s468 = sand.u32 %s40, 1
        %s469 = smul.addr %s468, 8
        %s470 = scalar_lea.vmem [#allocation2], %s469
        %p471 = pneg %p53
        %p472 = pneg %p50
        %p473 = pneg %p74
        %p474 = pneg %p71
        %p475 = pneg %p95
        %p476 = pneg %p92
        %p477 = pneg %p116
        %p478 = pneg %p113
        %p479 = pneg %p137
        %p480 = pneg %p134
        %p481 = pneg %p158
        %p482 = pneg %p155
        %p483 = pneg %p179
        %p484 = pneg %p176
        %p485 = pneg %p200
        %p486 = pneg %p197
        %p487 = pneg %p221
        %p488 = pneg %p218
        %p489 = pneg %p242
        %p490 = pneg %p239
        %p491 = pneg %p263
        %p492 = pneg %p260
        %p493 = pneg %p284
        %p494 = pneg %p281
        %p495 = pneg %p310
        %p496 = pneg %p307
        %s497 = sand.u32 %s297, 1
        %s498 = scalar_lea.sflag [#allocation4], %s497
        %s499 = sand.u32 %s297, 1
        %s500 = smul.addr %s499, 4
        %s501 = scalar_lea.vmem [#allocation13], %s500
        %v502 = vld [vmem:[%s441] sm:$0xff]
        %v503 = vld [vmem:[#allocation5] sm:$0xff]
        %v504 = vld [vmem:[#allocation5 + $0x8] sm:$0xff]
        %v505 = vld [vmem:[#allocation5 + $0x10] sm:$0xff]
        %v506 = vld [vmem:[#allocation5 + $0x18] sm:$0xff]
        %v507 = vld [vmem:[#allocation5 + $0x20] sm:$0xff]
        %v508 = vld [vmem:[#allocation5 + $0x28] sm:$0xff]
        %v509 = vld [vmem:[#allocation5 + $0x30] sm:$0xff]
        %v510 = vld [vmem:[#allocation5 + $0x38] sm:$0xff]
        %v511 = vld [vmem:[#allocation5 + $0x40] sm:$0xff]
        %v512 = vld [vmem:[#allocation5 + $0x48] sm:$0xff]
        %v513 = vld [vmem:[#allocation5 + $0x50] sm:$0xff]
        %v514 = vld [vmem:[#allocation5 + $0x58] sm:$0xff]
        %v515 = vld [vmem:[#allocation5 + $0x60] sm:$0xff]
        %v516 = vld [vmem:[#allocation5 + $0x68] sm:$0xff]
        %v517 = vld [vmem:[#allocation5 + $0x70] sm:$0xff]
        %v518 = vld [vmem:[#allocation5 + $0x78] sm:$0xff]
        %v519 = vld [vmem:[%s2] sm:$0xff]
        %v521 = vlaneseq
        %v522 = vshrl.u32 %v521, 7
        %v523 = vsub.s32 0, %v522
        %v524 = vrot.slane %v519, %v523
        %v525 = vlaneseq
        %v526 = vshrl.u32 %v525, 7
        %v527 = vsub.s32 1, %v526
        %v528 = vrot.slane %v519, %v527
        %v529 = vlaneseq
        %v530 = vshrl.u32 %v529, 7
        %v531 = vsub.s32 2, %v530
        %v532 = vrot.slane %v519, %v531
        %v533 = vlaneseq
        %v534 = vshrl.u32 %v533, 7
        %v535 = vsub.s32 3, %v534
        %v536 = vrot.slane %v519, %v535
        %v537 = vlaneseq
        %v538 = vshrl.u32 %v537, 7
        %v539 = vsub.s32 4, %v538
        %v540 = vrot.slane %v519, %v539
        %v541 = vlaneseq
        %v542 = vshrl.u32 %v541, 7
        %v543 = vsub.s32 5, %v542
        %v544 = vrot.slane %v519, %v543
        %v545 = vlaneseq
        %v546 = vshrl.u32 %v545, 7
        %v547 = vsub.s32 6, %v546
        %v548 = vrot.slane %v519, %v547
        %v549 = vlaneseq
        %v550 = vshrl.u32 %v549, 7
        %v551 = vsub.s32 7, %v550
        %v552 = vrot.slane %v519, %v551
        %vm561 = vcmask 130048
        %v563 = vsel %vm561, %v502, 0
        %565 = vmatprep.subr.mxu0 0.0
        %566 = vmatpush1.msra.mxu0 0.0
        %567 = vmatprep.subr.mxu0 0.0
        %568 = vmatpush1.msra.mxu0 0.0
        %569 = vmatprep.subr.mxu0 0.0
        %570 = vmatpush1.msra.mxu0 0.0
        %571 = vmatprep.subr.mxu0 0.0
        %572 = vmatpush1.msra.mxu0 0.0
        %573 = vmatprep.subr.mxu0 0.0
        %574 = vmatpush1.msra.mxu0 0.0
        %575 = vmatprep.subr.mxu0 0.0
        %576 = vmatpush1.msra.mxu0 0.0
        %577 = vmatprep.subr.mxu0 0.0
        %578 = vmatpush1.msra.mxu0 0.0
        %579 = vmatprep.subr.mxu0 0.0
        %580 = vmatpush1.msra.mxu0 0.0
        %581 = vmatprep.subr.mxu0 0.0
        %582 = vmatpush1.msra.mxu0 0.0
        %583 = vmatprep.subr.mxu0 0.0
        %584 = vmatpush1.msra.mxu0 0.0
        %585 = vmatprep.subr.mxu0 0.0
        %586 = vmatpush1.msra.mxu0 0.0
        %587 = vmatprep.subr.mxu0 0.0
        %588 = vmatpush1.msra.mxu0 0.0
        %589 = vmatprep.subr.mxu0 0.0
        %590 = vmatpush1.msra.mxu0 0.0
        %591 = vmatprep.subr.mxu0 0.0
        %592 = vmatpush1.msra.mxu0 0.0
        %593 = vmatprep.subr.mxu0 %v512
        %594 = vmatpush1.msra.mxu0 %v511
        %595 = vmatprep.subr.mxu0 %v504
        %596 = vmatpush1.msra.mxu0 %v503
        %597 = vmatprep.subr.mxu0 0.0
        %598 = vmatpush2.msra.mxu0 0.0
        %599 = vmatprep.subr.mxu0 0.0
        %600 = vmatpush2.msra.mxu0 0.0
        %601 = vmatprep.subr.mxu0 0.0
        %602 = vmatpush2.msra.mxu0 0.0
        %603 = vmatprep.subr.mxu0 0.0
        %604 = vmatpush2.msra.mxu0 0.0
        %605 = vmatprep.subr.mxu0 0.0
        %606 = vmatpush2.msra.mxu0 0.0
        %607 = vmatprep.subr.mxu0 0.0
        %608 = vmatpush2.msra.mxu0 0.0
        %609 = vmatprep.subr.mxu0 0.0
        %610 = vmatpush2.msra.mxu0 0.0
        %611 = vmatprep.subr.mxu0 0.0
        %612 = vmatpush2.msra.mxu0 0.0
        %613 = vmatprep.subr.mxu0 0.0
        %614 = vmatpush2.msra.mxu0 0.0
        %615 = vmatprep.subr.mxu0 0.0
        %616 = vmatpush2.msra.mxu0 0.0
        %617 = vmatprep.subr.mxu0 0.0
        %618 = vmatpush2.msra.mxu0 0.0
        %619 = vmatprep.subr.mxu0 0.0
        %620 = vmatpush2.msra.mxu0 0.0
        %621 = vmatprep.subr.mxu0 0.0
        %622 = vmatpush2.msra.mxu0 0.0
        %623 = vmatprep.subr.mxu0 0.0
        %624 = vmatpush2.msra.mxu0 0.0
        %625 = vmatprep.subr.mxu0 0.0
        %626 = vmatpush2.msra.mxu0 0.0
        %627 = vmatprep.subr.mxu0 0.0
        %628 = vmatpush2.msra.mxu0 0.0
        %629 = vmatprep.mubr.f32.mxu0 0.0
        %630 = vmatmul.mubr.f32.gmra.mxu0 %v563
        %v631 = vpop.f32.mrf.mxu0
        %v632 = vadd.f32 %v524, %v631
        %v633 = vpop.f32.mrf.mxu0
        %v634 = vadd.f32 %v528, %v633
        %635 = vdwg.mxu0
        %636 = vmatprep.subr.mxu0 0.0
        %637 = vmatpush1.msra.mxu0 0.0
        %638 = vmatprep.subr.mxu0 0.0
        %639 = vmatpush1.msra.mxu0 0.0
        %640 = vmatprep.subr.mxu0 0.0
        %641 = vmatpush1.msra.mxu0 0.0
        %642 = vmatprep.subr.mxu0 0.0
        %643 = vmatpush1.msra.mxu0 0.0
        %644 = vmatprep.subr.mxu0 0.0
        %645 = vmatpush1.msra.mxu0 0.0
        %646 = vmatprep.subr.mxu0 0.0
        %647 = vmatpush1.msra.mxu0 0.0
        %648 = vmatprep.subr.mxu0 0.0
        %649 = vmatpush1.msra.mxu0 0.0
        %650 = vmatprep.subr.mxu0 0.0
        %651 = vmatpush1.msra.mxu0 0.0
        %652 = vmatprep.subr.mxu0 0.0
        %653 = vmatpush1.msra.mxu0 0.0
        %654 = vmatprep.subr.mxu0 0.0
        %655 = vmatpush1.msra.mxu0 0.0
        %656 = vmatprep.subr.mxu0 0.0
        %657 = vmatpush1.msra.mxu0 0.0
        %658 = vmatprep.subr.mxu0 0.0
        %659 = vmatpush1.msra.mxu0 0.0
        %660 = vmatprep.subr.mxu0 0.0
        %661 = vmatpush1.msra.mxu0 0.0
        %662 = vmatprep.subr.mxu0 0.0
        %663 = vmatpush1.msra.mxu0 0.0
        %664 = vmatprep.subr.mxu0 %v514
        %665 = vmatpush1.msra.mxu0 %v513
        %666 = vmatprep.subr.mxu0 %v506
        %667 = vmatpush1.msra.mxu0 %v505
        %668 = vmatprep.subr.mxu0 0.0
        %669 = vmatpush2.msra.mxu0 0.0
        %670 = vmatprep.subr.mxu0 0.0
        %671 = vmatpush2.msra.mxu0 0.0
        %672 = vmatprep.subr.mxu0 0.0
        %673 = vmatpush2.msra.mxu0 0.0
        %674 = vmatprep.subr.mxu0 0.0
        %675 = vmatpush2.msra.mxu0 0.0
        %676 = vmatprep.subr.mxu0 0.0
        %677 = vmatpush2.msra.mxu0 0.0
        %678 = vmatprep.subr.mxu0 0.0
        %679 = vmatpush2.msra.mxu0 0.0
        %680 = vmatprep.subr.mxu0 0.0
        %681 = vmatpush2.msra.mxu0 0.0
        %682 = vmatprep.subr.mxu0 0.0
        %683 = vmatpush2.msra.mxu0 0.0
        %684 = vmatprep.subr.mxu0 0.0
        %685 = vmatpush2.msra.mxu0 0.0
        %686 = vmatprep.subr.mxu0 0.0
        %687 = vmatpush2.msra.mxu0 0.0
        %688 = vmatprep.subr.mxu0 0.0
        %689 = vmatpush2.msra.mxu0 0.0
        %690 = vmatprep.subr.mxu0 0.0
        %691 = vmatpush2.msra.mxu0 0.0
        %692 = vmatprep.subr.mxu0 0.0
        %693 = vmatpush2.msra.mxu0 0.0
        %694 = vmatprep.subr.mxu0 0.0
        %695 = vmatpush2.msra.mxu0 0.0
        %696 = vmatprep.subr.mxu0 0.0
        %697 = vmatpush2.msra.mxu0 0.0
        %698 = vmatprep.subr.mxu0 0.0
        %699 = vmatpush2.msra.mxu0 0.0
        %700 = vmatprep.mubr.f32.mxu0 0.0
        %701 = vmatmul.mubr.f32.gmra.mxu0 %v563
        %v702 = vpop.f32.mrf.mxu0
        %v703 = vadd.f32 %v532, %v702
        %v704 = vpop.f32.mrf.mxu0
        %v705 = vadd.f32 %v536, %v704
        %706 = vdwg.mxu0
        %707 = vmatprep.subr.mxu0 0.0
        %708 = vmatpush1.msra.mxu0 0.0
        %709 = vmatprep.subr.mxu0 0.0
        %710 = vmatpush1.msra.mxu0 0.0
        %711 = vmatprep.subr.mxu0 0.0
        %712 = vmatpush1.msra.mxu0 0.0
        %713 = vmatprep.subr.mxu0 0.0
        %714 = vmatpush1.msra.mxu0 0.0
        %715 = vmatprep.subr.mxu0 0.0
        %716 = vmatpush1.msra.mxu0 0.0
        %717 = vmatprep.subr.mxu0 0.0
        %718 = vmatpush1.msra.mxu0 0.0
        %719 = vmatprep.subr.mxu0 0.0
        %720 = vmatpush1.msra.mxu0 0.0
        %721 = vmatprep.subr.mxu0 0.0
        %722 = vmatpush1.msra.mxu0 0.0
        %723 = vmatprep.subr.mxu0 0.0
        %724 = vmatpush1.msra.mxu0 0.0
        %725 = vmatprep.subr.mxu0 0.0
        %726 = vmatpush1.msra.mxu0 0.0
        %727 = vmatprep.subr.mxu0 0.0
        %728 = vmatpush1.msra.mxu0 0.0
        %729 = vmatprep.subr.mxu0 0.0
        %730 = vmatpush1.msra.mxu0 0.0
        %731 = vmatprep.subr.mxu0 0.0
        %732 = vmatpush1.msra.mxu0 0.0
        %733 = vmatprep.subr.mxu0 0.0
        %734 = vmatpush1.msra.mxu0 0.0
        %735 = vmatprep.subr.mxu0 %v516
        %736 = vmatpush1.msra.mxu0 %v515
        %737 = vmatprep.subr.mxu0 %v508
        %738 = vmatpush1.msra.mxu0 %v507
        %739 = vmatprep.subr.mxu0 0.0
        %740 = vmatpush2.msra.mxu0 0.0
        %741 = vmatprep.subr.mxu0 0.0
        %742 = vmatpush2.msra.mxu0 0.0
        %743 = vmatprep.subr.mxu0 0.0
        %744 = vmatpush2.msra.mxu0 0.0
        %745 = vmatprep.subr.mxu0 0.0
        %746 = vmatpush2.msra.mxu0 0.0
        %747 = vmatprep.subr.mxu0 0.0
        %748 = vmatpush2.msra.mxu0 0.0
        %749 = vmatprep.subr.mxu0 0.0
        %750 = vmatpush2.msra.mxu0 0.0
        %751 = vmatprep.subr.mxu0 0.0
        %752 = vmatpush2.msra.mxu0 0.0
        %753 = vmatprep.subr.mxu0 0.0
        %754 = vmatpush2.msra.mxu0 0.0
        %755 = vmatprep.subr.mxu0 0.0
        %756 = vmatpush2.msra.mxu0 0.0
        %757 = vmatprep.subr.mxu0 0.0
        %758 = vmatpush2.msra.mxu0 0.0
        %759 = vmatprep.subr.mxu0 0.0
        %760 = vmatpush2.msra.mxu0 0.0
        %761 = vmatprep.subr.mxu0 0.0
        %762 = vmatpush2.msra.mxu0 0.0
        %763 = vmatprep.subr.mxu0 0.0
        %764 = vmatpush2.msra.mxu0 0.0
        %765 = vmatprep.subr.mxu0 0.0
        %766 = vmatpush2.msra.mxu0 0.0
        %767 = vmatprep.subr.mxu0 0.0
        %768 = vmatpush2.msra.mxu0 0.0
        %769 = vmatprep.subr.mxu0 0.0
        %770 = vmatpush2.msra.mxu0 0.0
        %771 = vmatprep.mubr.f32.mxu0 0.0
        %772 = vmatmul.mubr.f32.gmra.mxu0 %v563
        %v773 = vpop.f32.mrf.mxu0
        %v774 = vadd.f32 %v540, %v773
        %v775 = vpop.f32.mrf.mxu0
        %v776 = vadd.f32 %v544, %v775
        %777 = vdwg.mxu0
        %778 = vmatprep.subr.mxu0 0.0
        %779 = vmatpush1.msra.mxu0 0.0
        %780 = vmatprep.subr.mxu0 0.0
        %781 = vmatpush1.msra.mxu0 0.0
        %782 = vmatprep.subr.mxu0 0.0
        %783 = vmatpush1.msra.mxu0 0.0
        %784 = vmatprep.subr.mxu0 0.0
        %785 = vmatpush1.msra.mxu0 0.0
        %786 = vmatprep.subr.mxu0 0.0
        %787 = vmatpush1.msra.mxu0 0.0
        %788 = vmatprep.subr.mxu0 0.0
        %789 = vmatpush1.msra.mxu0 0.0
        %790 = vmatprep.subr.mxu0 0.0
        %791 = vmatpush1.msra.mxu0 0.0
        %792 = vmatprep.subr.mxu0 0.0
        %793 = vmatpush1.msra.mxu0 0.0
        %794 = vmatprep.subr.mxu0 0.0
        %795 = vmatpush1.msra.mxu0 0.0
        %796 = vmatprep.subr.mxu0 0.0
        %797 = vmatpush1.msra.mxu0 0.0
        %798 = vmatprep.subr.mxu0 0.0
        %799 = vmatpush1.msra.mxu0 0.0
        %800 = vmatprep.subr.mxu0 0.0
        %801 = vmatpush1.msra.mxu0 0.0
        %802 = vmatprep.subr.mxu0 0.0
        %803 = vmatpush1.msra.mxu0 0.0
        %804 = vmatprep.subr.mxu0 0.0
        %805 = vmatpush1.msra.mxu0 0.0
        %806 = vmatprep.subr.mxu0 %v518
        %807 = vmatpush1.msra.mxu0 %v517
        %808 = vmatprep.subr.mxu0 %v510
        %809 = vmatpush1.msra.mxu0 %v509
        %810 = vmatprep.subr.mxu0 0.0
        %811 = vmatpush2.msra.mxu0 0.0
        %812 = vmatprep.subr.mxu0 0.0
        %813 = vmatpush2.msra.mxu0 0.0
        %814 = vmatprep.subr.mxu0 0.0
        %815 = vmatpush2.msra.mxu0 0.0
        %816 = vmatprep.subr.mxu0 0.0
        %817 = vmatpush2.msra.mxu0 0.0
        %818 = vmatprep.subr.mxu0 0.0
        %819 = vmatpush2.msra.mxu0 0.0
        %820 = vmatprep.subr.mxu0 0.0
        %821 = vmatpush2.msra.mxu0 0.0
        %822 = vmatprep.subr.mxu0 0.0
        %823 = vmatpush2.msra.mxu0 0.0
        %824 = vmatprep.subr.mxu0 0.0
        %825 = vmatpush2.msra.mxu0 0.0
        %826 = vmatprep.subr.mxu0 0.0
        %827 = vmatpush2.msra.mxu0 0.0
        %828 = vmatprep.subr.mxu0 0.0
        %829 = vmatpush2.msra.mxu0 0.0
        %830 = vmatprep.subr.mxu0 0.0
        %831 = vmatpush2.msra.mxu0 0.0
        %832 = vmatprep.subr.mxu0 0.0
        %833 = vmatpush2.msra.mxu0 0.0
        %834 = vmatprep.subr.mxu0 0.0
        %835 = vmatpush2.msra.mxu0 0.0
        %836 = vmatprep.subr.mxu0 0.0
        %837 = vmatpush2.msra.mxu0 0.0
        %838 = vmatprep.subr.mxu0 0.0
        %839 = vmatpush2.msra.mxu0 0.0
        %840 = vmatprep.subr.mxu0 0.0
        %841 = vmatpush2.msra.mxu0 0.0
        %842 = vmatprep.mubr.f32.mxu0 0.0
        %843 = vmatmul.mubr.f32.gmra.mxu0 %v563
        %v844 = vpop.f32.mrf.mxu0
        %v845 = vadd.f32 %v548, %v844
        %v846 = vpop.f32.mrf.mxu0
        %v847 = vadd.f32 %v552, %v846
        %848 = vdwg.mxu0
        %v849 = vmax.f32 %v632, 0.0
        %v850 = vmax.f32 %v634, 0.0
        %v851 = vmax.f32 %v703, 0.0
        %v852 = vmax.f32 %v705, 0.0
        %v853 = vmax.f32 %v774, 0.0
        %v854 = vmax.f32 %v776, 0.0
        %v855 = vmax.f32 %v845, 0.0
        %v856 = vmax.f32 %v847, 0.0
        %v857 = vld [vmem:[#allocation7] sm:$0xff]
        %v858 = vld [vmem:[#allocation7 + $0x8] sm:$0xff]
        %v859 = vld [vmem:[#allocation7 + $0x10] sm:$0xff]
        %v860 = vld [vmem:[#allocation7 + $0x18] sm:$0xff]
        %v861 = vld [vmem:[#allocation7 + $0x20] sm:$0xff]
        %v862 = vld [vmem:[#allocation7 + $0x28] sm:$0xff]
        %v863 = vld [vmem:[#allocation7 + $0x30] sm:$0xff]
        %v864 = vld [vmem:[#allocation7 + $0x38] sm:$0xff]
        %v865 = vld [vmem:[#allocation7 + $0x40] sm:$0xff]
        %v866 = vld [vmem:[#allocation7 + $0x48] sm:$0xff]
        %v867 = vld [vmem:[#allocation7 + $0x50] sm:$0xff]
        %v868 = vld [vmem:[#allocation7 + $0x58] sm:$0xff]
        %v869 = vld [vmem:[#allocation7 + $0x60] sm:$0xff]
        %v870 = vld [vmem:[#allocation7 + $0x68] sm:$0xff]
        %v871 = vld [vmem:[#allocation7 + $0x70] sm:$0xff]
        %v872 = vld [vmem:[#allocation7 + $0x78] sm:$0xff]
        %v873 = vld [vmem:[#allocation7 + $0x80] sm:$0xff]
        %v874 = vld [vmem:[#allocation7 + $0x88] sm:$0xff]
        %v875 = vld [vmem:[#allocation7 + $0x90] sm:$0xff]
        %v876 = vld [vmem:[#allocation7 + $0x98] sm:$0xff]
        %v877 = vld [vmem:[#allocation7 + $0xa0] sm:$0xff]
        %v878 = vld [vmem:[#allocation7 + $0xa8] sm:$0xff]
        %v879 = vld [vmem:[#allocation7 + $0xb0] sm:$0xff]
        %v880 = vld [vmem:[#allocation7 + $0xb8] sm:$0xff]
        %v881 = vld [vmem:[#allocation7 + $0xc0] sm:$0xff]
        %v882 = vld [vmem:[#allocation7 + $0xc8] sm:$0xff]
        %v883 = vld [vmem:[#allocation7 + $0xd0] sm:$0xff]
        %v884 = vld [vmem:[#allocation7 + $0xd8] sm:$0xff]
        %v885 = vld [vmem:[#allocation7 + $0xe0] sm:$0xff]
        %v886 = vld [vmem:[#allocation7 + $0xe8] sm:$0xff]
        %v887 = vld [vmem:[#allocation7 + $0xf0] sm:$0xff]
        %v888 = vld [vmem:[#allocation7 + $0xf8] sm:$0xff]
        %v889 = vld [vmem:[#allocation7 + $0x100] sm:$0xff]
        %v890 = vld [vmem:[#allocation7 + $0x108] sm:$0xff]
        %v891 = vld [vmem:[#allocation7 + $0x110] sm:$0xff]
        %v892 = vld [vmem:[#allocation7 + $0x118] sm:$0xff]
        %v893 = vld [vmem:[#allocation7 + $0x120] sm:$0xff]
        %v894 = vld [vmem:[#allocation7 + $0x128] sm:$0xff]
        %v895 = vld [vmem:[#allocation7 + $0x130] sm:$0xff]
        %v896 = vld [vmem:[#allocation7 + $0x138] sm:$0xff]
        %v897 = vld [vmem:[#allocation7 + $0x140] sm:$0xff]
        %v898 = vld [vmem:[#allocation7 + $0x148] sm:$0xff]
        %v899 = vld [vmem:[#allocation7 + $0x150] sm:$0xff]
        %v900 = vld [vmem:[#allocation7 + $0x158] sm:$0xff]
        %v901 = vld [vmem:[#allocation7 + $0x160] sm:$0xff]
        %v902 = vld [vmem:[#allocation7 + $0x168] sm:$0xff]
        %v903 = vld [vmem:[#allocation7 + $0x170] sm:$0xff]
        %v904 = vld [vmem:[#allocation7 + $0x178] sm:$0xff]
        %v905 = vld [vmem:[#allocation7 + $0x180] sm:$0xff]
        %v906 = vld [vmem:[#allocation7 + $0x188] sm:$0xff]
        %v907 = vld [vmem:[#allocation7 + $0x190] sm:$0xff]
        %v908 = vld [vmem:[#allocation7 + $0x198] sm:$0xff]
        %v909 = vld [vmem:[#allocation7 + $0x1a0] sm:$0xff]
        %v910 = vld [vmem:[#allocation7 + $0x1a8] sm:$0xff]
        %v911 = vld [vmem:[#allocation7 + $0x1b0] sm:$0xff]
        %v912 = vld [vmem:[#allocation7 + $0x1b8] sm:$0xff]
        %v913 = vld [vmem:[#allocation7 + $0x1c0] sm:$0xff]
        %v914 = vld [vmem:[#allocation7 + $0x1c8] sm:$0xff]
        %v915 = vld [vmem:[#allocation7 + $0x1d0] sm:$0xff]
        %v916 = vld [vmem:[#allocation7 + $0x1d8] sm:$0xff]
        %v917 = vld [vmem:[#allocation7 + $0x1e0] sm:$0xff]
        %v918 = vld [vmem:[#allocation7 + $0x1e8] sm:$0xff]
        %v919 = vld [vmem:[#allocation7 + $0x1f0] sm:$0xff]
        %v920 = vld [vmem:[#allocation7 + $0x1f8] sm:$0xff]
        %v921 = vld [vmem:[#allocation7 + $0x200] sm:$0xff]
        %v922 = vld [vmem:[#allocation7 + $0x208] sm:$0xff]
        %v923 = vld [vmem:[#allocation7 + $0x210] sm:$0xff]
        %v924 = vld [vmem:[#allocation7 + $0x218] sm:$0xff]
        %v925 = vld [vmem:[#allocation7 + $0x220] sm:$0xff]
        %v926 = vld [vmem:[#allocation7 + $0x228] sm:$0xff]
        %v927 = vld [vmem:[#allocation7 + $0x230] sm:$0xff]
        %v928 = vld [vmem:[#allocation7 + $0x238] sm:$0xff]
        %v929 = vld [vmem:[#allocation7 + $0x240] sm:$0xff]
        %v930 = vld [vmem:[#allocation7 + $0x248] sm:$0xff]
        %v931 = vld [vmem:[#allocation7 + $0x250] sm:$0xff]
        %v932 = vld [vmem:[#allocation7 + $0x258] sm:$0xff]
        %v933 = vld [vmem:[#allocation7 + $0x260] sm:$0xff]
        %v934 = vld [vmem:[#allocation7 + $0x268] sm:$0xff]
        %v935 = vld [vmem:[#allocation7 + $0x270] sm:$0xff]
        %v936 = vld [vmem:[#allocation7 + $0x278] sm:$0xff]
        %v937 = vld [vmem:[#allocation7 + $0x280] sm:$0xff]
        %v938 = vld [vmem:[#allocation7 + $0x288] sm:$0xff]
        %v939 = vld [vmem:[#allocation7 + $0x290] sm:$0xff]
        %v940 = vld [vmem:[#allocation7 + $0x298] sm:$0xff]
        %v941 = vld [vmem:[#allocation7 + $0x2a0] sm:$0xff]
        %v942 = vld [vmem:[#allocation7 + $0x2a8] sm:$0xff]
        %v943 = vld [vmem:[#allocation7 + $0x2b0] sm:$0xff]
        %v944 = vld [vmem:[#allocation7 + $0x2b8] sm:$0xff]
        %v945 = vld [vmem:[#allocation7 + $0x2c0] sm:$0xff]
        %v946 = vld [vmem:[#allocation7 + $0x2c8] sm:$0xff]
        %v947 = vld [vmem:[#allocation7 + $0x2d0] sm:$0xff]
        %v948 = vld [vmem:[#allocation7 + $0x2d8] sm:$0xff]
        %v949 = vld [vmem:[#allocation7 + $0x2e0] sm:$0xff]
        %v950 = vld [vmem:[#allocation7 + $0x2e8] sm:$0xff]
        %v951 = vld [vmem:[#allocation7 + $0x2f0] sm:$0xff]
        %v952 = vld [vmem:[#allocation7 + $0x2f8] sm:$0xff]
        %v953 = vld [vmem:[#allocation7 + $0x300] sm:$0xff]
        %v954 = vld [vmem:[#allocation7 + $0x308] sm:$0xff]
        %v955 = vld [vmem:[#allocation7 + $0x310] sm:$0xff]
        %v956 = vld [vmem:[#allocation7 + $0x318] sm:$0xff]
        %v957 = vld [vmem:[#allocation7 + $0x320] sm:$0xff]
        %v958 = vld [vmem:[#allocation7 + $0x328] sm:$0xff]
        %v959 = vld [vmem:[#allocation7 + $0x330] sm:$0xff]
        %v960 = vld [vmem:[#allocation7 + $0x338] sm:$0xff]
        %v961 = vld [vmem:[#allocation7 + $0x340] sm:$0xff]
        %v962 = vld [vmem:[#allocation7 + $0x348] sm:$0xff]
        %v963 = vld [vmem:[#allocation7 + $0x350] sm:$0xff]
        %v964 = vld [vmem:[#allocation7 + $0x358] sm:$0xff]
        %v965 = vld [vmem:[#allocation7 + $0x360] sm:$0xff]
        %v966 = vld [vmem:[#allocation7 + $0x368] sm:$0xff]
        %v967 = vld [vmem:[#allocation7 + $0x370] sm:$0xff]
        %v968 = vld [vmem:[#allocation7 + $0x378] sm:$0xff]
        %v969 = vld [vmem:[#allocation7 + $0x380] sm:$0xff]
        %v970 = vld [vmem:[#allocation7 + $0x388] sm:$0xff]
        %v971 = vld [vmem:[#allocation7 + $0x390] sm:$0xff]
        %v972 = vld [vmem:[#allocation7 + $0x398] sm:$0xff]
        %v973 = vld [vmem:[#allocation7 + $0x3a0] sm:$0xff]
        %v974 = vld [vmem:[#allocation7 + $0x3a8] sm:$0xff]
        %v975 = vld [vmem:[#allocation7 + $0x3b0] sm:$0xff]
        %v976 = vld [vmem:[#allocation7 + $0x3b8] sm:$0xff]
        %v977 = vld [vmem:[#allocation7 + $0x3c0] sm:$0xff]
        %v978 = vld [vmem:[#allocation7 + $0x3c8] sm:$0xff]
        %v979 = vld [vmem:[#allocation7 + $0x3d0] sm:$0xff]
        %v980 = vld [vmem:[#allocation7 + $0x3d8] sm:$0xff]
        %v981 = vld [vmem:[#allocation7 + $0x3e0] sm:$0xff]
        %v982 = vld [vmem:[#allocation7 + $0x3e8] sm:$0xff]
        %v983 = vld [vmem:[#allocation7 + $0x3f0] sm:$0xff]
        %v984 = vld [vmem:[#allocation7 + $0x3f8] sm:$0xff]
        %v985 = vld [vmem:[%s4] sm:$0x1]
        %v987 = vlaneseq
        %v988 = vshrl.u32 %v987, 7
        %v989 = vsub.s32 0, %v988
        %v990 = vrot.slane %v985, %v989
        %992 = vmatprep.subr.mxu0 0.0
        %993 = vmatpush1.msra.mxu0 %v872
        %994 = vmatprep.subr.mxu0 0.0
        %995 = vmatpush1.msra.mxu0 %v871
        %996 = vmatprep.subr.mxu0 0.0
        %997 = vmatpush1.msra.mxu0 %v870
        %998 = vmatprep.subr.mxu0 0.0
        %999 = vmatpush1.msra.mxu0 %v869
        %1000 = vmatprep.subr.mxu0 0.0
        %1001 = vmatpush1.msra.mxu0 %v868
        %1002 = vmatprep.subr.mxu0 0.0
        %1003 = vmatpush1.msra.mxu0 %v867
        %1004 = vmatprep.subr.mxu0 0.0
        %1005 = vmatpush1.msra.mxu0 %v866
        %1006 = vmatprep.subr.mxu0 0.0
        %1007 = vmatpush1.msra.mxu0 %v865
        %1008 = vmatprep.subr.mxu0 0.0
        %1009 = vmatpush1.msra.mxu0 %v864
        %1010 = vmatprep.subr.mxu0 0.0
        %1011 = vmatpush1.msra.mxu0 %v863
        %1012 = vmatprep.subr.mxu0 0.0
        %1013 = vmatpush1.msra.mxu0 %v862
        %1014 = vmatprep.subr.mxu0 0.0
        %1015 = vmatpush1.msra.mxu0 %v861
        %1016 = vmatprep.subr.mxu0 0.0
        %1017 = vmatpush1.msra.mxu0 %v860
        %1018 = vmatprep.subr.mxu0 0.0
        %1019 = vmatpush1.msra.mxu0 %v859
        %1020 = vmatprep.subr.mxu0 0.0
        %1021 = vmatpush1.msra.mxu0 %v858
        %1022 = vmatprep.subr.mxu0 0.0
        %1023 = vmatpush1.msra.mxu0 %v857
        %1024 = vmatprep.subr.mxu0 0.0
        %1025 = vmatpush2.msra.mxu0 %v888
        %1026 = vmatprep.subr.mxu0 0.0
        %1027 = vmatpush2.msra.mxu0 %v887
        %1028 = vmatprep.subr.mxu0 0.0
        %1029 = vmatpush2.msra.mxu0 %v886
        %1030 = vmatprep.subr.mxu0 0.0
        %1031 = vmatpush2.msra.mxu0 %v885
        %1032 = vmatprep.subr.mxu0 0.0
        %1033 = vmatpush2.msra.mxu0 %v884
        %1034 = vmatprep.subr.mxu0 0.0
        %1035 = vmatpush2.msra.mxu0 %v883
        %1036 = vmatprep.subr.mxu0 0.0
        %1037 = vmatpush2.msra.mxu0 %v882
        %1038 = vmatprep.subr.mxu0 0.0
        %1039 = vmatpush2.msra.mxu0 %v881
        %1040 = vmatprep.subr.mxu0 0.0
        %1041 = vmatpush2.msra.mxu0 %v880
        %1042 = vmatprep.subr.mxu0 0.0
        %1043 = vmatpush2.msra.mxu0 %v879
        %1044 = vmatprep.subr.mxu0 0.0
        %1045 = vmatpush2.msra.mxu0 %v878
        %1046 = vmatprep.subr.mxu0 0.0
        %1047 = vmatpush2.msra.mxu0 %v877
        %1048 = vmatprep.subr.mxu0 0.0
        %1049 = vmatpush2.msra.mxu0 %v876
        %1050 = vmatprep.subr.mxu0 0.0
        %1051 = vmatpush2.msra.mxu0 %v875
        %1052 = vmatprep.subr.mxu0 0.0
        %1053 = vmatpush2.msra.mxu0 %v874
        %1054 = vmatprep.subr.mxu0 0.0
        %1055 = vmatpush2.msra.mxu0 %v873
        %1056 = vmatprep.mubr.f32.mxu0 %v850
        %1057 = vmatmul.mubr.f32.gmra.mxu0 %v849
        %v1058 = vpop.f32.mrf.mxu0
        %v1059 = vadd.f32 %v990, %v1058
        %v1060 = vpop.f32.mrf.mxu0
        %1061 = vdwg.mxu0
        %1062 = vmatprep.subr.mxu0 0.0
        %1063 = vmatpush1.msra.mxu0 %v904
        %1064 = vmatprep.subr.mxu0 0.0
        %1065 = vmatpush1.msra.mxu0 %v903
        %1066 = vmatprep.subr.mxu0 0.0
        %1067 = vmatpush1.msra.mxu0 %v902
        %1068 = vmatprep.subr.mxu0 0.0
        %1069 = vmatpush1.msra.mxu0 %v901
        %1070 = vmatprep.subr.mxu0 0.0
        %1071 = vmatpush1.msra.mxu0 %v900
        %1072 = vmatprep.subr.mxu0 0.0
        %1073 = vmatpush1.msra.mxu0 %v899
        %1074 = vmatprep.subr.mxu0 0.0
        %1075 = vmatpush1.msra.mxu0 %v898
        %1076 = vmatprep.subr.mxu0 0.0
        %1077 = vmatpush1.msra.mxu0 %v897
        %1078 = vmatprep.subr.mxu0 0.0
        %1079 = vmatpush1.msra.mxu0 %v896
        %1080 = vmatprep.subr.mxu0 0.0
        %1081 = vmatpush1.msra.mxu0 %v895
        %1082 = vmatprep.subr.mxu0 0.0
        %1083 = vmatpush1.msra.mxu0 %v894
        %1084 = vmatprep.subr.mxu0 0.0
        %1085 = vmatpush1.msra.mxu0 %v893
        %1086 = vmatprep.subr.mxu0 0.0
        %1087 = vmatpush1.msra.mxu0 %v892
        %1088 = vmatprep.subr.mxu0 0.0
        %1089 = vmatpush1.msra.mxu0 %v891
        %1090 = vmatprep.subr.mxu0 0.0
        %1091 = vmatpush1.msra.mxu0 %v890
        %1092 = vmatprep.subr.mxu0 0.0
        %1093 = vmatpush1.msra.mxu0 %v889
        %1094 = vmatprep.subr.mxu0 0.0
        %1095 = vmatpush2.msra.mxu0 %v920
        %1096 = vmatprep.subr.mxu0 0.0
        %1097 = vmatpush2.msra.mxu0 %v919
        %1098 = vmatprep.subr.mxu0 0.0
        %1099 = vmatpush2.msra.mxu0 %v918
        %1100 = vmatprep.subr.mxu0 0.0
        %1101 = vmatpush2.msra.mxu0 %v917
        %1102 = vmatprep.subr.mxu0 0.0
        %1103 = vmatpush2.msra.mxu0 %v916
        %1104 = vmatprep.subr.mxu0 0.0
        %1105 = vmatpush2.msra.mxu0 %v915
        %1106 = vmatprep.subr.mxu0 0.0
        %1107 = vmatpush2.msra.mxu0 %v914
        %1108 = vmatprep.subr.mxu0 0.0
        %1109 = vmatpush2.msra.mxu0 %v913
        %1110 = vmatprep.subr.mxu0 0.0
        %1111 = vmatpush2.msra.mxu0 %v912
        %1112 = vmatprep.subr.mxu0 0.0
        %1113 = vmatpush2.msra.mxu0 %v911
        %1114 = vmatprep.subr.mxu0 0.0
        %1115 = vmatpush2.msra.mxu0 %v910
        %1116 = vmatprep.subr.mxu0 0.0
        %1117 = vmatpush2.msra.mxu0 %v909
        %1118 = vmatprep.subr.mxu0 0.0
        %1119 = vmatpush2.msra.mxu0 %v908
        %1120 = vmatprep.subr.mxu0 0.0
        %1121 = vmatpush2.msra.mxu0 %v907
        %1122 = vmatprep.subr.mxu0 0.0
        %1123 = vmatpush2.msra.mxu0 %v906
        %1124 = vmatprep.subr.mxu0 0.0
        %1125 = vmatpush2.msra.mxu0 %v905
        %1126 = vmatprep.mubr.f32.mxu0 %v852
        %1127 = vmatmul.mubr.f32.gmra.mxu0 %v851
        %v1128 = vpop.f32.mrf.mxu0
        %v1129 = vadd.f32 %v1059, %v1128
        %v1130 = vpop.f32.mrf.mxu0
        %1131 = vdwg.mxu0
        %1132 = vmatprep.subr.mxu0 0.0
        %1133 = vmatpush1.msra.mxu0 %v936
        %1134 = vmatprep.subr.mxu0 0.0
        %1135 = vmatpush1.msra.mxu0 %v935
        %1136 = vmatprep.subr.mxu0 0.0
        %1137 = vmatpush1.msra.mxu0 %v934
        %1138 = vmatprep.subr.mxu0 0.0
        %1139 = vmatpush1.msra.mxu0 %v933
        %1140 = vmatprep.subr.mxu0 0.0
        %1141 = vmatpush1.msra.mxu0 %v932
        %1142 = vmatprep.subr.mxu0 0.0
        %1143 = vmatpush1.msra.mxu0 %v931
        %1144 = vmatprep.subr.mxu0 0.0
        %1145 = vmatpush1.msra.mxu0 %v930
        %1146 = vmatprep.subr.mxu0 0.0
        %1147 = vmatpush1.msra.mxu0 %v929
        %1148 = vmatprep.subr.mxu0 0.0
        %1149 = vmatpush1.msra.mxu0 %v928
        %1150 = vmatprep.subr.mxu0 0.0
        %1151 = vmatpush1.msra.mxu0 %v927
        %1152 = vmatprep.subr.mxu0 0.0
        %1153 = vmatpush1.msra.mxu0 %v926
        %1154 = vmatprep.subr.mxu0 0.0
        %1155 = vmatpush1.msra.mxu0 %v925
        %1156 = vmatprep.subr.mxu0 0.0
        %1157 = vmatpush1.msra.mxu0 %v924
        %1158 = vmatprep.subr.mxu0 0.0
        %1159 = vmatpush1.msra.mxu0 %v923
        %1160 = vmatprep.subr.mxu0 0.0
        %1161 = vmatpush1.msra.mxu0 %v922
        %1162 = vmatprep.subr.mxu0 0.0
        %1163 = vmatpush1.msra.mxu0 %v921
        %1164 = vmatprep.subr.mxu0 0.0
        %1165 = vmatpush2.msra.mxu0 %v952
        %1166 = vmatprep.subr.mxu0 0.0
        %1167 = vmatpush2.msra.mxu0 %v951
        %1168 = vmatprep.subr.mxu0 0.0
        %1169 = vmatpush2.msra.mxu0 %v950
        %1170 = vmatprep.subr.mxu0 0.0
        %1171 = vmatpush2.msra.mxu0 %v949
        %1172 = vmatprep.subr.mxu0 0.0
        %1173 = vmatpush2.msra.mxu0 %v948
        %1174 = vmatprep.subr.mxu0 0.0
        %1175 = vmatpush2.msra.mxu0 %v947
        %1176 = vmatprep.subr.mxu0 0.0
        %1177 = vmatpush2.msra.mxu0 %v946
        %1178 = vmatprep.subr.mxu0 0.0
        %1179 = vmatpush2.msra.mxu0 %v945
        %1180 = vmatprep.subr.mxu0 0.0
        %1181 = vmatpush2.msra.mxu0 %v944
        %1182 = vmatprep.subr.mxu0 0.0
        %1183 = vmatpush2.msra.mxu0 %v943
        %1184 = vmatprep.subr.mxu0 0.0
        %1185 = vmatpush2.msra.mxu0 %v942
        %1186 = vmatprep.subr.mxu0 0.0
        %1187 = vmatpush2.msra.mxu0 %v941
        %1188 = vmatprep.subr.mxu0 0.0
        %1189 = vmatpush2.msra.mxu0 %v940
        %1190 = vmatprep.subr.mxu0 0.0
        %1191 = vmatpush2.msra.mxu0 %v939
        %1192 = vmatprep.subr.mxu0 0.0
        %1193 = vmatpush2.msra.mxu0 %v938
        %1194 = vmatprep.subr.mxu0 0.0
        %1195 = vmatpush2.msra.mxu0 %v937
        %1196 = vmatprep.mubr.f32.mxu0 %v854
        %1197 = vmatmul.mubr.f32.gmra.mxu0 %v853
        %v1198 = vpop.f32.mrf.mxu0
        %v1199 = vadd.f32 %v1129, %v1198
        %v1200 = vpop.f32.mrf.mxu0
        %1201 = vdwg.mxu0
        %1202 = vmatprep.subr.mxu0 0.0
        %1203 = vmatpush1.msra.mxu0 %v968
        %1204 = vmatprep.subr.mxu0 0.0
        %1205 = vmatpush1.msra.mxu0 %v967
        %1206 = vmatprep.subr.mxu0 0.0
        %1207 = vmatpush1.msra.mxu0 %v966
        %1208 = vmatprep.subr.mxu0 0.0
        %1209 = vmatpush1.msra.mxu0 %v965
        %1210 = vmatprep.subr.mxu0 0.0
        %1211 = vmatpush1.msra.mxu0 %v964
        %1212 = vmatprep.subr.mxu0 0.0
        %1213 = vmatpush1.msra.mxu0 %v963
        %1214 = vmatprep.subr.mxu0 0.0
        %1215 = vmatpush1.msra.mxu0 %v962
        %1216 = vmatprep.subr.mxu0 0.0
        %1217 = vmatpush1.msra.mxu0 %v961
        %1218 = vmatprep.subr.mxu0 0.0
        %1219 = vmatpush1.msra.mxu0 %v960
        %1220 = vmatprep.subr.mxu0 0.0
        %1221 = vmatpush1.msra.mxu0 %v959
        %1222 = vmatprep.subr.mxu0 0.0
        %1223 = vmatpush1.msra.mxu0 %v958
        %1224 = vmatprep.subr.mxu0 0.0
        %1225 = vmatpush1.msra.mxu0 %v957
        %1226 = vmatprep.subr.mxu0 0.0
        %1227 = vmatpush1.msra.mxu0 %v956
        %1228 = vmatprep.subr.mxu0 0.0
        %1229 = vmatpush1.msra.mxu0 %v955
        %1230 = vmatprep.subr.mxu0 0.0
        %1231 = vmatpush1.msra.mxu0 %v954
        %1232 = vmatprep.subr.mxu0 0.0
        %1233 = vmatpush1.msra.mxu0 %v953
        %1234 = vmatprep.subr.mxu0 0.0
        %1235 = vmatpush2.msra.mxu0 %v984
        %1236 = vmatprep.subr.mxu0 0.0
        %1237 = vmatpush2.msra.mxu0 %v983
        %1238 = vmatprep.subr.mxu0 0.0
        %1239 = vmatpush2.msra.mxu0 %v982
        %1240 = vmatprep.subr.mxu0 0.0
        %1241 = vmatpush2.msra.mxu0 %v981
        %1242 = vmatprep.subr.mxu0 0.0
        %1243 = vmatpush2.msra.mxu0 %v980
        %1244 = vmatprep.subr.mxu0 0.0
        %1245 = vmatpush2.msra.mxu0 %v979
        %1246 = vmatprep.subr.mxu0 0.0
        %1247 = vmatpush2.msra.mxu0 %v978
        %1248 = vmatprep.subr.mxu0 0.0
        %1249 = vmatpush2.msra.mxu0 %v977
        %1250 = vmatprep.subr.mxu0 0.0
        %1251 = vmatpush2.msra.mxu0 %v976
        %1252 = vmatprep.subr.mxu0 0.0
        %1253 = vmatpush2.msra.mxu0 %v975
        %1254 = vmatprep.subr.mxu0 0.0
        %1255 = vmatpush2.msra.mxu0 %v974
        %1256 = vmatprep.subr.mxu0 0.0
        %1257 = vmatpush2.msra.mxu0 %v973
        %1258 = vmatprep.subr.mxu0 0.0
        %1259 = vmatpush2.msra.mxu0 %v972
        %1260 = vmatprep.subr.mxu0 0.0
        %1261 = vmatpush2.msra.mxu0 %v971
        %1262 = vmatprep.subr.mxu0 0.0
        %1263 = vmatpush2.msra.mxu0 %v970
        %1264 = vmatprep.subr.mxu0 0.0
        %1265 = vmatpush2.msra.mxu0 %v969
        %1266 = vmatprep.mubr.f32.mxu0 %v856
        %1267 = vmatmul.mubr.f32.gmra.mxu0 %v855
        %v1268 = vpop.f32.mrf.mxu0
        %v1269 = vadd.f32 %v1199, %v1268
        %v1270 = vpop.f32.mrf.mxu0
        %1271 = vdwg.mxu0
        %v1272 = vld [vmem:[%s10] sm:$0x1]
        %vm1273 = vcmask 64512
        %v1275 = vsel %vm1273, %v1272, 0
        %1277 = vmatprep.subr.mxu0 0.0
        %1278 = vmatpush1.msra.mxu0 0.0
        %1279 = vmatprep.subr.mxu0 0.0
        %1280 = vmatpush1.msra.mxu0 0.0
        %1281 = vmatprep.subr.mxu0 0.0
        %1282 = vmatpush1.msra.mxu0 0.0
        %1283 = vmatprep.subr.mxu0 0.0
        %1284 = vmatpush1.msra.mxu0 0.0
        %1285 = vmatprep.subr.mxu0 0.0
        %1286 = vmatpush1.msra.mxu0 0.0
        %1287 = vmatprep.subr.mxu0 0.0
        %1288 = vmatpush1.msra.mxu0 0.0
        %1289 = vmatprep.subr.mxu0 0.0
        %1290 = vmatpush1.msra.mxu0 0.0
        %1291 = vmatprep.subr.mxu0 0.0
        %1292 = vmatpush1.msra.mxu0 0.0
        %1293 = vmatprep.subr.mxu0 0.0
        %1294 = vmatpush1.msra.mxu0 0.0
        %1295 = vmatprep.subr.mxu0 0.0
        %1296 = vmatpush1.msra.mxu0 0.0
        %1297 = vmatprep.subr.mxu0 0.0
        %1298 = vmatpush1.msra.mxu0 0.0
        %1299 = vmatprep.subr.mxu0 0.0
        %1300 = vmatpush1.msra.mxu0 0.0
        %1301 = vmatprep.subr.mxu0 0.0
        %1302 = vmatpush1.msra.mxu0 0.0
        %1303 = vmatprep.subr.mxu0 0.0
        %1304 = vmatpush1.msra.mxu0 0.0
        %1305 = vmatprep.subr.mxu0 0.0
        %1306 = vmatpush1.msra.mxu0 0.0
        %1307 = vmatprep.subr.mxu0 0.0
        %1308 = vmatpush1.msra.mxu0 %v1269
        %1309 = vmatprep.subr.mxu0 0.0
        %1310 = vmatpush2.msra.mxu0 0.0
        %1311 = vmatprep.subr.mxu0 0.0
        %1312 = vmatpush2.msra.mxu0 0.0
        %1313 = vmatprep.subr.mxu0 0.0
        %1314 = vmatpush2.msra.mxu0 0.0
        %1315 = vmatprep.subr.mxu0 0.0
        %1316 = vmatpush2.msra.mxu0 0.0
        %1317 = vmatprep.subr.mxu0 0.0
        %1318 = vmatpush2.msra.mxu0 0.0
        %1319 = vmatprep.subr.mxu0 0.0
        %1320 = vmatpush2.msra.mxu0 0.0
        %1321 = vmatprep.subr.mxu0 0.0
        %1322 = vmatpush2.msra.mxu0 0.0
        %1323 = vmatprep.subr.mxu0 0.0
        %1324 = vmatpush2.msra.mxu0 0.0
        %1325 = vmatprep.subr.mxu0 0.0
        %1326 = vmatpush2.msra.mxu0 0.0
        %1327 = vmatprep.subr.mxu0 0.0
        %1328 = vmatpush2.msra.mxu0 0.0
        %1329 = vmatprep.subr.mxu0 0.0
        %1330 = vmatpush2.msra.mxu0 0.0
        %1331 = vmatprep.subr.mxu0 0.0
        %1332 = vmatpush2.msra.mxu0 0.0
        %1333 = vmatprep.subr.mxu0 0.0
        %1334 = vmatpush2.msra.mxu0 0.0
        %1335 = vmatprep.subr.mxu0 0.0
        %1336 = vmatpush2.msra.mxu0 0.0
        %1337 = vmatprep.subr.mxu0 0.0
        %1338 = vmatpush2.msra.mxu0 0.0
        %1339 = vmatprep.subr.mxu0 0.0
        %1340 = vmatpush2.msra.mxu0 0.0
        %1341 = vmatprep.mubr.f32.mxu0 0.0
        %1342 = vmatmul.mubr.f32.gmra.mxu0 %v1275
        %v1343 = vpop.f32.mrf.mxu0
        %v1344 = vadd.f32 0.0, %v1343
        %v1345 = vpop.f32.mrf.mxu0
        %1346 = vdwg.mxu0
        %v1347 = vld [vmem:[#allocation10] sm:$0xff]
        %v1348 = vld [vmem:[#allocation10 + $0x8] sm:$0xff]
        %v1349 = vld [vmem:[#allocation10 + $0x10] sm:$0xff]
        %v1350 = vld [vmem:[#allocation10 + $0x18] sm:$0xff]
        %v1351 = vld [vmem:[#allocation10 + $0x20] sm:$0xff]
        %v1352 = vld [vmem:[#allocation10 + $0x28] sm:$0xff]
        %v1353 = vld [vmem:[#allocation10 + $0x30] sm:$0xff]
        %v1354 = vld [vmem:[#allocation10 + $0x38] sm:$0xff]
        %v1355 = vld [vmem:[#allocation10 + $0x40] sm:$0xff]
        %v1356 = vld [vmem:[#allocation10 + $0x48] sm:$0xff]
        %v1357 = vld [vmem:[#allocation10 + $0x50] sm:$0xff]
        %v1358 = vld [vmem:[#allocation10 + $0x58] sm:$0xff]
        %v1359 = vld [vmem:[#allocation10 + $0x60] sm:$0xff]
        %v1360 = vld [vmem:[#allocation10 + $0x68] sm:$0xff]
        %v1361 = vld [vmem:[#allocation10 + $0x70] sm:$0xff]
        %v1362 = vld [vmem:[#allocation10 + $0x78] sm:$0xff]
        %v1363 = vld [vmem:[#allocation10 + $0x80] sm:$0xff]
        %v1364 = vld [vmem:[#allocation10 + $0x88] sm:$0xff]
        %v1365 = vld [vmem:[#allocation10 + $0x90] sm:$0xff]
        %v1366 = vld [vmem:[#allocation10 + $0x98] sm:$0xff]
        %v1367 = vld [vmem:[#allocation10 + $0xa0] sm:$0xff]
        %v1368 = vld [vmem:[#allocation10 + $0xa8] sm:$0xff]
        %v1369 = vld [vmem:[#allocation10 + $0xb0] sm:$0xff]
        %v1370 = vld [vmem:[#allocation10 + $0xb8] sm:$0xff]
        %v1371 = vld [vmem:[#allocation10 + $0xc0] sm:$0xff]
        %v1372 = vld [vmem:[#allocation10 + $0xc8] sm:$0xff]
        %v1373 = vld [vmem:[#allocation10 + $0xd0] sm:$0xff]
        %v1374 = vld [vmem:[#allocation10 + $0xd8] sm:$0xff]
        %v1375 = vld [vmem:[#allocation10 + $0xe0] sm:$0xff]
        %v1376 = vld [vmem:[#allocation10 + $0xe8] sm:$0xff]
        %v1377 = vld [vmem:[#allocation10 + $0xf0] sm:$0xff]
        %v1378 = vld [vmem:[#allocation10 + $0xf8] sm:$0xff]
        %v1379 = vld [vmem:[%s7] sm:$0x3]
        %v1381 = vlaneseq
        %v1382 = vshrl.u32 %v1381, 7
        %v1383 = vsub.s32 0, %v1382
        %v1384 = vrot.slane %v1379, %v1383
        %v1385 = vlaneseq
        %v1386 = vshrl.u32 %v1385, 7
        %v1387 = vsub.s32 1, %v1386
        %v1388 = vrot.slane %v1379, %v1387
        %1391 = vmatprep.subr.mxu0 %v1378
        %1392 = vmatpush1.msra.mxu0 %v1377
        %1393 = vmatprep.subr.mxu0 %v1376
        %1394 = vmatpush1.msra.mxu0 %v1375
        %1395 = vmatprep.subr.mxu0 %v1374
        %1396 = vmatpush1.msra.mxu0 %v1373
        %1397 = vmatprep.subr.mxu0 %v1372
        %1398 = vmatpush1.msra.mxu0 %v1371
        %1399 = vmatprep.subr.mxu0 %v1370
        %1400 = vmatpush1.msra.mxu0 %v1369
        %1401 = vmatprep.subr.mxu0 %v1368
        %1402 = vmatpush1.msra.mxu0 %v1367
        %1403 = vmatprep.subr.mxu0 %v1366
        %1404 = vmatpush1.msra.mxu0 %v1365
        %1405 = vmatprep.subr.mxu0 %v1364
        %1406 = vmatpush1.msra.mxu0 %v1363
        %1407 = vmatprep.subr.mxu0 %v1362
        %1408 = vmatpush1.msra.mxu0 %v1361
        %1409 = vmatprep.subr.mxu0 %v1360
        %1410 = vmatpush1.msra.mxu0 %v1359
        %1411 = vmatprep.subr.mxu0 %v1358
        %1412 = vmatpush1.msra.mxu0 %v1357
        %1413 = vmatprep.subr.mxu0 %v1356
        %1414 = vmatpush1.msra.mxu0 %v1355
        %1415 = vmatprep.subr.mxu0 %v1354
        %1416 = vmatpush1.msra.mxu0 %v1353
        %1417 = vmatprep.subr.mxu0 %v1352
        %1418 = vmatpush1.msra.mxu0 %v1351
        %1419 = vmatprep.subr.mxu0 %v1350
        %1420 = vmatpush1.msra.mxu0 %v1349
        %1421 = vmatprep.subr.mxu0 %v1348
        %1422 = vmatpush1.msra.mxu0 %v1347
        %1423 = vmatprep.subr.mxu0 0.0
        %1424 = vmatpush2.msra.mxu0 0.0
        %1425 = vmatprep.subr.mxu0 0.0
        %1426 = vmatpush2.msra.mxu0 0.0
        %1427 = vmatprep.subr.mxu0 0.0
        %1428 = vmatpush2.msra.mxu0 0.0
        %1429 = vmatprep.subr.mxu0 0.0
        %1430 = vmatpush2.msra.mxu0 0.0
        %1431 = vmatprep.subr.mxu0 0.0
        %1432 = vmatpush2.msra.mxu0 0.0
        %1433 = vmatprep.subr.mxu0 0.0
        %1434 = vmatpush2.msra.mxu0 0.0
        %1435 = vmatprep.subr.mxu0 0.0
        %1436 = vmatpush2.msra.mxu0 0.0
        %1437 = vmatprep.subr.mxu0 0.0
        %1438 = vmatpush2.msra.mxu0 0.0
        %1439 = vmatprep.subr.mxu0 0.0
        %1440 = vmatpush2.msra.mxu0 0.0
        %1441 = vmatprep.subr.mxu0 0.0
        %1442 = vmatpush2.msra.mxu0 0.0
        %1443 = vmatprep.subr.mxu0 0.0
        %1444 = vmatpush2.msra.mxu0 0.0
        %1445 = vmatprep.subr.mxu0 0.0
        %1446 = vmatpush2.msra.mxu0 0.0
        %1447 = vmatprep.subr.mxu0 0.0
        %1448 = vmatpush2.msra.mxu0 0.0
        %1449 = vmatprep.subr.mxu0 0.0
        %1450 = vmatpush2.msra.mxu0 0.0
        %1451 = vmatprep.subr.mxu0 0.0
        %1452 = vmatpush2.msra.mxu0 0.0
        %1453 = vmatprep.subr.mxu0 0.0
        %1454 = vmatpush2.msra.mxu0 0.0
        %1455 = vmatprep.mubr.f32.mxu0 0.0
        %1456 = vmatmul.mubr.f32.gmra.mxu0 %v1344
        %v1457 = vpop.f32.mrf.mxu0
        %v1458 = vadd.f32 %v1384, %v1457
        %v1459 = vpop.f32.mrf.mxu0
        %v1460 = vadd.f32 %v1388, %v1459
        %1461 = vdwg.mxu0
        %v1462 = vld [vmem:[#allocation8] sm:$0xff]
        %v1463 = vld [vmem:[#allocation8 + $0x8] sm:$0xff]
        %v1464 = vld [vmem:[#allocation8 + $0x10] sm:$0xff]
        %v1465 = vld [vmem:[#allocation8 + $0x18] sm:$0xff]
        %v1466 = vld [vmem:[#allocation8 + $0x20] sm:$0xff]
        %v1467 = vld [vmem:[#allocation8 + $0x28] sm:$0xff]
        %v1468 = vld [vmem:[#allocation8 + $0x30] sm:$0xff]
        %v1469 = vld [vmem:[#allocation8 + $0x38] sm:$0xff]
        %v1470 = vld [vmem:[#allocation8 + $0x40] sm:$0xff]
        %v1471 = vld [vmem:[#allocation8 + $0x48] sm:$0xff]
        %v1472 = vld [vmem:[#allocation8 + $0x50] sm:$0xff]
        %v1473 = vld [vmem:[#allocation8 + $0x58] sm:$0xff]
        %v1474 = vld [vmem:[#allocation8 + $0x60] sm:$0xff]
        %v1475 = vld [vmem:[#allocation8 + $0x68] sm:$0xff]
        %v1476 = vld [vmem:[#allocation8 + $0x70] sm:$0xff]
        %v1477 = vld [vmem:[#allocation8 + $0x78] sm:$0xff]
        %v1478 = vld [vmem:[#allocation8 + $0x80] sm:$0xff]
        %v1479 = vld [vmem:[#allocation8 + $0x88] sm:$0xff]
        %v1480 = vld [vmem:[#allocation8 + $0x90] sm:$0xff]
        %v1481 = vld [vmem:[#allocation8 + $0x98] sm:$0xff]
        %v1482 = vld [vmem:[#allocation8 + $0xa0] sm:$0xff]
        %v1483 = vld [vmem:[#allocation8 + $0xa8] sm:$0xff]
        %v1484 = vld [vmem:[#allocation8 + $0xb0] sm:$0xff]
        %v1485 = vld [vmem:[#allocation8 + $0xb8] sm:$0xff]
        %v1486 = vld [vmem:[#allocation8 + $0xc0] sm:$0xff]
        %v1487 = vld [vmem:[#allocation8 + $0xc8] sm:$0xff]
        %v1488 = vld [vmem:[#allocation8 + $0xd0] sm:$0xff]
        %v1489 = vld [vmem:[#allocation8 + $0xd8] sm:$0xff]
        %v1490 = vld [vmem:[#allocation8 + $0xe0] sm:$0xff]
        %v1491 = vld [vmem:[#allocation8 + $0xe8] sm:$0xff]
        %v1492 = vld [vmem:[#allocation8 + $0xf0] sm:$0xff]
        %v1493 = vld [vmem:[#allocation8 + $0xf8] sm:$0xff]
        %v1494 = vlaneseq
        %v1495 = vshrl.u32 %v1494, 7
        %v1496 = vsub.s32 0, %v1495
        %v1497 = vrot.slane %v1458, %v1496
        %v1498 = vlaneseq
        %v1499 = vshrl.u32 %v1498, 7
        %v1500 = vsub.s32 0, %v1499
        %v1501 = vrot.slane %v1460, %v1500
        %1502 = vmatprep.subr.mxu0 %v1493
        %1503 = vmatpush1.msra.mxu0 %v1492
        %1504 = vmatprep.subr.mxu0 %v1491
        %1505 = vmatpush1.msra.mxu0 %v1490
        %1506 = vmatprep.subr.mxu0 %v1489
        %1507 = vmatpush1.msra.mxu0 %v1488
        %1508 = vmatprep.subr.mxu0 %v1487
        %1509 = vmatpush1.msra.mxu0 %v1486
        %1510 = vmatprep.subr.mxu0 %v1485
        %1511 = vmatpush1.msra.mxu0 %v1484
        %1512 = vmatprep.subr.mxu0 %v1483
        %1513 = vmatpush1.msra.mxu0 %v1482
        %1514 = vmatprep.subr.mxu0 %v1481
        %1515 = vmatpush1.msra.mxu0 %v1480
        %1516 = vmatprep.subr.mxu0 %v1479
        %1517 = vmatpush1.msra.mxu0 %v1478
        %1518 = vmatprep.subr.mxu0 %v1477
        %1519 = vmatpush1.msra.mxu0 %v1476
        %1520 = vmatprep.subr.mxu0 %v1475
        %1521 = vmatpush1.msra.mxu0 %v1474
        %1522 = vmatprep.subr.mxu0 %v1473
        %1523 = vmatpush1.msra.mxu0 %v1472
        %1524 = vmatprep.subr.mxu0 %v1471
        %1525 = vmatpush1.msra.mxu0 %v1470
        %1526 = vmatprep.subr.mxu0 %v1469
        %1527 = vmatpush1.msra.mxu0 %v1468
        %1528 = vmatprep.subr.mxu0 %v1467
        %1529 = vmatpush1.msra.mxu0 %v1466
        %1530 = vmatprep.subr.mxu0 %v1465
        %1531 = vmatpush1.msra.mxu0 %v1464
        %1532 = vmatprep.subr.mxu0 %v1463
        %1533 = vmatpush1.msra.mxu0 %v1462
        %1534 = vmatprep.subr.mxu0 0.0
        %1535 = vmatpush2.msra.mxu0 0.0
        %1536 = vmatprep.subr.mxu0 0.0
        %1537 = vmatpush2.msra.mxu0 0.0
        %1538 = vmatprep.subr.mxu0 0.0
        %1539 = vmatpush2.msra.mxu0 0.0
        %1540 = vmatprep.subr.mxu0 0.0
        %1541 = vmatpush2.msra.mxu0 0.0
        %1542 = vmatprep.subr.mxu0 0.0
        %1543 = vmatpush2.msra.mxu0 0.0
        %1544 = vmatprep.subr.mxu0 0.0
        %1545 = vmatpush2.msra.mxu0 0.0
        %1546 = vmatprep.subr.mxu0 0.0
        %1547 = vmatpush2.msra.mxu0 0.0
        %1548 = vmatprep.subr.mxu0 0.0
        %1549 = vmatpush2.msra.mxu0 0.0
        %1550 = vmatprep.subr.mxu0 0.0
        %1551 = vmatpush2.msra.mxu0 0.0
        %1552 = vmatprep.subr.mxu0 0.0
        %1553 = vmatpush2.msra.mxu0 0.0
        %1554 = vmatprep.subr.mxu0 0.0
        %1555 = vmatpush2.msra.mxu0 0.0
        %1556 = vmatprep.subr.mxu0 0.0
        %1557 = vmatpush2.msra.mxu0 0.0
        %1558 = vmatprep.subr.mxu0 0.0
        %1559 = vmatpush2.msra.mxu0 0.0
        %1560 = vmatprep.subr.mxu0 0.0
        %1561 = vmatpush2.msra.mxu0 0.0
        %1562 = vmatprep.subr.mxu0 0.0
        %1563 = vmatpush2.msra.mxu0 0.0
        %1564 = vmatprep.subr.mxu0 0.0
        %1565 = vmatpush2.msra.mxu0 0.0
        %1566 = vmatprep.mubr.f32.mxu0 0.0
        %1567 = vmatmul.mubr.f32.gmra.mxu0 %v1269
        %v1568 = vpop.f32.mrf.mxu0
        %v1569 = vadd.f32 %v1497, %v1568
        %v1570 = vpop.f32.mrf.mxu0
        %v1571 = vadd.f32 %v1501, %v1570
        %1572 = vdwg.mxu0
        %v1573 = vmax.f32 %v1569, 0.0
        %v1574 = vmax.f32 %v1571, 0.0
        %1575 = vmatprep.subr.mxu0 0.0
        %1576 = vmatpush1.msra.mxu0 0.0
        %1577 = vmatprep.subr.mxu0 0.0
        %1578 = vmatpush1.msra.mxu0 0.0
        %1579 = vmatprep.subr.mxu0 0.0
        %1580 = vmatpush1.msra.mxu0 0.0
        %1581 = vmatprep.subr.mxu0 0.0
        %1582 = vmatpush1.msra.mxu0 0.0
        %1583 = vmatprep.subr.mxu0 0.0
        %1584 = vmatpush1.msra.mxu0 0.0
        %1585 = vmatprep.subr.mxu0 0.0
        %1586 = vmatpush1.msra.mxu0 0.0
        %1587 = vmatprep.subr.mxu0 0.0
        %1588 = vmatpush1.msra.mxu0 0.0
        %1589 = vmatprep.subr.mxu0 0.0
        %1590 = vmatpush1.msra.mxu0 0.0
        %1591 = vmatprep.subr.mxu0 0.0
        %1592 = vmatpush1.msra.mxu0 0.0
        %1593 = vmatprep.subr.mxu0 0.0
        %1594 = vmatpush1.msra.mxu0 0.0
        %1595 = vmatprep.subr.mxu0 0.0
        %1596 = vmatpush1.msra.mxu0 0.0
        %1597 = vmatprep.subr.mxu0 0.0
        %1598 = vmatpush1.msra.mxu0 0.0
        %1599 = vmatprep.subr.mxu0 0.0
        %1600 = vmatpush1.msra.mxu0 0.0
        %1601 = vmatprep.subr.mxu0 0.0
        %1602 = vmatpush1.msra.mxu0 0.0
        %1603 = vmatprep.subr.mxu0 0.0
        %1604 = vmatpush1.msra.mxu0 0.0
        %1605 = vmatprep.subr.mxu0 %v1574
        %1606 = vmatpush1.msra.mxu0 %v1573
        %1607 = vmatprep.subr.mxu0 0.0
        %1608 = vmatpush2.msra.mxu0 0.0
        %1609 = vmatprep.subr.mxu0 0.0
        %1610 = vmatpush2.msra.mxu0 0.0
        %1611 = vmatprep.subr.mxu0 0.0
        %1612 = vmatpush2.msra.mxu0 0.0
        %1613 = vmatprep.subr.mxu0 0.0
        %1614 = vmatpush2.msra.mxu0 0.0
        %1615 = vmatprep.subr.mxu0 0.0
        %1616 = vmatpush2.msra.mxu0 0.0
        %1617 = vmatprep.subr.mxu0 0.0
        %1618 = vmatpush2.msra.mxu0 0.0
        %1619 = vmatprep.subr.mxu0 0.0
        %1620 = vmatpush2.msra.mxu0 0.0
        %1621 = vmatprep.subr.mxu0 0.0
        %1622 = vmatpush2.msra.mxu0 0.0
        %1623 = vmatprep.subr.mxu0 0.0
        %1624 = vmatpush2.msra.mxu0 0.0
        %1625 = vmatprep.subr.mxu0 0.0
        %1626 = vmatpush2.msra.mxu0 0.0
        %1627 = vmatprep.subr.mxu0 0.0
        %1628 = vmatpush2.msra.mxu0 0.0
        %1629 = vmatprep.subr.mxu0 0.0
        %1630 = vmatpush2.msra.mxu0 0.0
        %1631 = vmatprep.subr.mxu0 0.0
        %1632 = vmatpush2.msra.mxu0 0.0
        %1633 = vmatprep.subr.mxu0 0.0
        %1634 = vmatpush2.msra.mxu0 0.0
        %1635 = vmatprep.subr.mxu0 0.0
        %1636 = vmatpush2.msra.mxu0 0.0
        %1637 = vmatprep.subr.mxu0 0.0
        %1638 = vmatpush2.msra.mxu0 0.0
        %1639 = vmatprep.mubr.f32.mxu0 0.0
        %1640 = vmatmul.mubr.f32.gmra.mxu0 %v1275
        %v1641 = vpop.f32.mrf.mxu0
        %v1642 = vadd.f32 0.0, %v1641
        %v1643 = vpop.f32.mrf.mxu0
        %v1644 = vadd.f32 0.0, %v1643
        %1645 = vdwg.mxu0
        %v1646 = vld [vmem:[#allocation11] sm:$0xff]
        %v1647 = vld [vmem:[#allocation11 + $0x8] sm:$0xff]
        %v1648 = vld [vmem:[#allocation11 + $0x10] sm:$0xff]
        %v1649 = vld [vmem:[#allocation11 + $0x18] sm:$0xff]
        %v1650 = vld [vmem:[#allocation11 + $0x20] sm:$0xff]
        %v1651 = vld [vmem:[#allocation11 + $0x28] sm:$0xff]
        %v1652 = vld [vmem:[#allocation11 + $0x30] sm:$0xff]
        %v1653 = vld [vmem:[#allocation11 + $0x38] sm:$0xff]
        %v1654 = vld [vmem:[#allocation11 + $0x40] sm:$0xff]
        %v1655 = vld [vmem:[#allocation11 + $0x48] sm:$0xff]
        %v1656 = vld [vmem:[#allocation11 + $0x50] sm:$0xff]
        %v1657 = vld [vmem:[#allocation11 + $0x58] sm:$0xff]
        %v1658 = vld [vmem:[#allocation11 + $0x60] sm:$0xff]
        %v1659 = vld [vmem:[#allocation11 + $0x68] sm:$0xff]
        %v1660 = vld [vmem:[#allocation11 + $0x70] sm:$0xff]
        %v1661 = vld [vmem:[#allocation11 + $0x78] sm:$0xff]
        %v1662 = vld [vmem:[#allocation11 + $0x80] sm:$0xff]
        %v1663 = vld [vmem:[#allocation11 + $0x88] sm:$0xff]
        %v1664 = vld [vmem:[#allocation11 + $0x90] sm:$0xff]
        %v1665 = vld [vmem:[#allocation11 + $0x98] sm:$0xff]
        %v1666 = vld [vmem:[#allocation11 + $0xa0] sm:$0xff]
        %v1667 = vld [vmem:[#allocation11 + $0xa8] sm:$0xff]
        %v1668 = vld [vmem:[#allocation11 + $0xb0] sm:$0xff]
        %v1669 = vld [vmem:[#allocation11 + $0xb8] sm:$0xff]
        %v1670 = vld [vmem:[#allocation11 + $0xc0] sm:$0xff]
        %v1671 = vld [vmem:[#allocation11 + $0xc8] sm:$0xff]
        %v1672 = vld [vmem:[#allocation11 + $0xd0] sm:$0xff]
        %v1673 = vld [vmem:[#allocation11 + $0xd8] sm:$0xff]
        %v1674 = vld [vmem:[#allocation11 + $0xe0] sm:$0xff]
        %v1675 = vld [vmem:[#allocation11 + $0xe8] sm:$0xff]
        %v1676 = vld [vmem:[#allocation11 + $0xf0] sm:$0xff]
        %v1677 = vld [vmem:[#allocation11 + $0xf8] sm:$0xff]
        %v1678 = vld [vmem:[#allocation11 + $0x100] sm:$0xff]
        %v1679 = vld [vmem:[#allocation11 + $0x108] sm:$0xff]
        %v1680 = vld [vmem:[#allocation11 + $0x110] sm:$0xff]
        %v1681 = vld [vmem:[#allocation11 + $0x118] sm:$0xff]
        %v1682 = vld [vmem:[#allocation11 + $0x120] sm:$0xff]
        %v1683 = vld [vmem:[#allocation11 + $0x128] sm:$0xff]
        %v1684 = vld [vmem:[#allocation11 + $0x130] sm:$0xff]
        %v1685 = vld [vmem:[#allocation11 + $0x138] sm:$0xff]
        %v1686 = vld [vmem:[#allocation11 + $0x140] sm:$0xff]
        %v1687 = vld [vmem:[#allocation11 + $0x148] sm:$0xff]
        %v1688 = vld [vmem:[#allocation11 + $0x150] sm:$0xff]
        %v1689 = vld [vmem:[#allocation11 + $0x158] sm:$0xff]
        %v1690 = vld [vmem:[#allocation11 + $0x160] sm:$0xff]
        %v1691 = vld [vmem:[#allocation11 + $0x168] sm:$0xff]
        %v1692 = vld [vmem:[#allocation11 + $0x170] sm:$0xff]
        %v1693 = vld [vmem:[#allocation11 + $0x178] sm:$0xff]
        %v1694 = vld [vmem:[#allocation11 + $0x180] sm:$0xff]
        %v1695 = vld [vmem:[#allocation11 + $0x188] sm:$0xff]
        %v1696 = vld [vmem:[#allocation11 + $0x190] sm:$0xff]
        %v1697 = vld [vmem:[#allocation11 + $0x198] sm:$0xff]
        %v1698 = vld [vmem:[#allocation11 + $0x1a0] sm:$0xff]
        %v1699 = vld [vmem:[#allocation11 + $0x1a8] sm:$0xff]
        %v1700 = vld [vmem:[#allocation11 + $0x1b0] sm:$0xff]
        %v1701 = vld [vmem:[#allocation11 + $0x1b8] sm:$0xff]
        %v1702 = vld [vmem:[#allocation11 + $0x1c0] sm:$0xff]
        %v1703 = vld [vmem:[#allocation11 + $0x1c8] sm:$0xff]
        %v1704 = vld [vmem:[#allocation11 + $0x1d0] sm:$0xff]
        %v1705 = vld [vmem:[#allocation11 + $0x1d8] sm:$0xff]
        %v1706 = vld [vmem:[#allocation11 + $0x1e0] sm:$0xff]
        %v1707 = vld [vmem:[#allocation11 + $0x1e8] sm:$0xff]
        %v1708 = vld [vmem:[#allocation11 + $0x1f0] sm:$0xff]
        %v1709 = vld [vmem:[#allocation11 + $0x1f8] sm:$0xff]
        %v1710 = vld [vmem:[#allocation11 + $0x200] sm:$0xff]
        %v1711 = vld [vmem:[#allocation11 + $0x208] sm:$0xff]
        %v1712 = vld [vmem:[#allocation11 + $0x210] sm:$0xff]
        %v1713 = vld [vmem:[#allocation11 + $0x218] sm:$0xff]
        %v1714 = vld [vmem:[#allocation11 + $0x220] sm:$0xff]
        %v1715 = vld [vmem:[#allocation11 + $0x228] sm:$0xff]
        %v1716 = vld [vmem:[#allocation11 + $0x230] sm:$0xff]
        %v1717 = vld [vmem:[#allocation11 + $0x238] sm:$0xff]
        %v1718 = vld [vmem:[#allocation11 + $0x240] sm:$0xff]
        %v1719 = vld [vmem:[#allocation11 + $0x248] sm:$0xff]
        %v1720 = vld [vmem:[#allocation11 + $0x250] sm:$0xff]
        %v1721 = vld [vmem:[#allocation11 + $0x258] sm:$0xff]
        %v1722 = vld [vmem:[#allocation11 + $0x260] sm:$0xff]
        %v1723 = vld [vmem:[#allocation11 + $0x268] sm:$0xff]
        %v1724 = vld [vmem:[#allocation11 + $0x270] sm:$0xff]
        %v1725 = vld [vmem:[#allocation11 + $0x278] sm:$0xff]
        %v1726 = vld [vmem:[#allocation11 + $0x280] sm:$0xff]
        %v1727 = vld [vmem:[#allocation11 + $0x288] sm:$0xff]
        %v1728 = vld [vmem:[#allocation11 + $0x290] sm:$0xff]
        %v1729 = vld [vmem:[#allocation11 + $0x298] sm:$0xff]
        %v1730 = vld [vmem:[#allocation11 + $0x2a0] sm:$0xff]
        %v1731 = vld [vmem:[#allocation11 + $0x2a8] sm:$0xff]
        %v1732 = vld [vmem:[#allocation11 + $0x2b0] sm:$0xff]
        %v1733 = vld [vmem:[#allocation11 + $0x2b8] sm:$0xff]
        %v1734 = vld [vmem:[#allocation11 + $0x2c0] sm:$0xff]
        %v1735 = vld [vmem:[#allocation11 + $0x2c8] sm:$0xff]
        %v1736 = vld [vmem:[#allocation11 + $0x2d0] sm:$0xff]
        %v1737 = vld [vmem:[#allocation11 + $0x2d8] sm:$0xff]
        %v1738 = vld [vmem:[#allocation11 + $0x2e0] sm:$0xff]
        %v1739 = vld [vmem:[#allocation11 + $0x2e8] sm:$0xff]
        %v1740 = vld [vmem:[#allocation11 + $0x2f0] sm:$0xff]
        %v1741 = vld [vmem:[#allocation11 + $0x2f8] sm:$0xff]
        %v1742 = vld [vmem:[#allocation11 + $0x300] sm:$0xff]
        %v1743 = vld [vmem:[#allocation11 + $0x308] sm:$0xff]
        %v1744 = vld [vmem:[#allocation11 + $0x310] sm:$0xff]
        %v1745 = vld [vmem:[#allocation11 + $0x318] sm:$0xff]
        %v1746 = vld [vmem:[#allocation11 + $0x320] sm:$0xff]
        %v1747 = vld [vmem:[#allocation11 + $0x328] sm:$0xff]
        %v1748 = vld [vmem:[#allocation11 + $0x330] sm:$0xff]
        %v1749 = vld [vmem:[#allocation11 + $0x338] sm:$0xff]
        %v1750 = vld [vmem:[#allocation11 + $0x340] sm:$0xff]
        %v1751 = vld [vmem:[#allocation11 + $0x348] sm:$0xff]
        %v1752 = vld [vmem:[#allocation11 + $0x350] sm:$0xff]
        %v1753 = vld [vmem:[#allocation11 + $0x358] sm:$0xff]
        %v1754 = vld [vmem:[#allocation11 + $0x360] sm:$0xff]
        %v1755 = vld [vmem:[#allocation11 + $0x368] sm:$0xff]
        %v1756 = vld [vmem:[#allocation11 + $0x370] sm:$0xff]
        %v1757 = vld [vmem:[#allocation11 + $0x378] sm:$0xff]
        %v1758 = vld [vmem:[#allocation11 + $0x380] sm:$0xff]
        %v1759 = vld [vmem:[#allocation11 + $0x388] sm:$0xff]
        %v1760 = vld [vmem:[#allocation11 + $0x390] sm:$0xff]
        %v1761 = vld [vmem:[#allocation11 + $0x398] sm:$0xff]
        %v1762 = vld [vmem:[#allocation11 + $0x3a0] sm:$0xff]
        %v1763 = vld [vmem:[#allocation11 + $0x3a8] sm:$0xff]
        %v1764 = vld [vmem:[#allocation11 + $0x3b0] sm:$0xff]
        %v1765 = vld [vmem:[#allocation11 + $0x3b8] sm:$0xff]
        %v1766 = vld [vmem:[#allocation11 + $0x3c0] sm:$0xff]
        %v1767 = vld [vmem:[#allocation11 + $0x3c8] sm:$0xff]
        %v1768 = vld [vmem:[#allocation11 + $0x3d0] sm:$0xff]
        %v1769 = vld [vmem:[#allocation11 + $0x3d8] sm:$0xff]
        %v1770 = vld [vmem:[#allocation11 + $0x3e0] sm:$0xff]
        %v1771 = vld [vmem:[#allocation11 + $0x3e8] sm:$0xff]
        %v1772 = vld [vmem:[#allocation11 + $0x3f0] sm:$0xff]
        %v1773 = vld [vmem:[#allocation11 + $0x3f8] sm:$0xff]
        %v1774 = vld [vmem:[%s9] sm:$0xf]
        %v1776 = vlaneseq
        %v1777 = vshrl.u32 %v1776, 7
        %v1778 = vsub.s32 0, %v1777
        %v1779 = vrot.slane %v1774, %v1778
        %v1780 = vlaneseq
        %v1781 = vshrl.u32 %v1780, 7
        %v1782 = vsub.s32 1, %v1781
        %v1783 = vrot.slane %v1774, %v1782
        %v1784 = vlaneseq
        %v1785 = vshrl.u32 %v1784, 7
        %v1786 = vsub.s32 2, %v1785
        %v1787 = vrot.slane %v1774, %v1786
        %v1788 = vlaneseq
        %v1789 = vshrl.u32 %v1788, 7
        %v1790 = vsub.s32 3, %v1789
        %v1791 = vrot.slane %v1774, %v1790
        %1796 = vmatprep.subr.mxu0 %v1707
        %1797 = vmatpush1.msra.mxu0 %v1706
        %1798 = vmatprep.subr.mxu0 %v1703
        %1799 = vmatpush1.msra.mxu0 %v1702
        %1800 = vmatprep.subr.mxu0 %v1699
        %1801 = vmatpush1.msra.mxu0 %v1698
        %1802 = vmatprep.subr.mxu0 %v1695
        %1803 = vmatpush1.msra.mxu0 %v1694
        %1804 = vmatprep.subr.mxu0 %v1691
        %1805 = vmatpush1.msra.mxu0 %v1690
        %1806 = vmatprep.subr.mxu0 %v1687
        %1807 = vmatpush1.msra.mxu0 %v1686
        %1808 = vmatprep.subr.mxu0 %v1683
        %1809 = vmatpush1.msra.mxu0 %v1682
        %1810 = vmatprep.subr.mxu0 %v1679
        %1811 = vmatpush1.msra.mxu0 %v1678
        %1812 = vmatprep.subr.mxu0 %v1675
        %1813 = vmatpush1.msra.mxu0 %v1674
        %1814 = vmatprep.subr.mxu0 %v1671
        %1815 = vmatpush1.msra.mxu0 %v1670
        %1816 = vmatprep.subr.mxu0 %v1667
        %1817 = vmatpush1.msra.mxu0 %v1666
        %1818 = vmatprep.subr.mxu0 %v1663
        %1819 = vmatpush1.msra.mxu0 %v1662
        %1820 = vmatprep.subr.mxu0 %v1659
        %1821 = vmatpush1.msra.mxu0 %v1658
        %1822 = vmatprep.subr.mxu0 %v1655
        %1823 = vmatpush1.msra.mxu0 %v1654
        %1824 = vmatprep.subr.mxu0 %v1651
        %1825 = vmatpush1.msra.mxu0 %v1650
        %1826 = vmatprep.subr.mxu0 %v1647
        %1827 = vmatpush1.msra.mxu0 %v1646
        %1828 = vmatprep.subr.mxu0 %v1771
        %1829 = vmatpush2.msra.mxu0 %v1770
        %1830 = vmatprep.subr.mxu0 %v1767
        %1831 = vmatpush2.msra.mxu0 %v1766
        %1832 = vmatprep.subr.mxu0 %v1763
        %1833 = vmatpush2.msra.mxu0 %v1762
        %1834 = vmatprep.subr.mxu0 %v1759
        %1835 = vmatpush2.msra.mxu0 %v1758
        %1836 = vmatprep.subr.mxu0 %v1755
        %1837 = vmatpush2.msra.mxu0 %v1754
        %1838 = vmatprep.subr.mxu0 %v1751
        %1839 = vmatpush2.msra.mxu0 %v1750
        %1840 = vmatprep.subr.mxu0 %v1747
        %1841 = vmatpush2.msra.mxu0 %v1746
        %1842 = vmatprep.subr.mxu0 %v1743
        %1843 = vmatpush2.msra.mxu0 %v1742
        %1844 = vmatprep.subr.mxu0 %v1739
        %1845 = vmatpush2.msra.mxu0 %v1738
        %1846 = vmatprep.subr.mxu0 %v1735
        %1847 = vmatpush2.msra.mxu0 %v1734
        %1848 = vmatprep.subr.mxu0 %v1731
        %1849 = vmatpush2.msra.mxu0 %v1730
        %1850 = vmatprep.subr.mxu0 %v1727
        %1851 = vmatpush2.msra.mxu0 %v1726
        %1852 = vmatprep.subr.mxu0 %v1723
        %1853 = vmatpush2.msra.mxu0 %v1722
        %1854 = vmatprep.subr.mxu0 %v1719
        %1855 = vmatpush2.msra.mxu0 %v1718
        %1856 = vmatprep.subr.mxu0 %v1715
        %1857 = vmatpush2.msra.mxu0 %v1714
        %1858 = vmatprep.subr.mxu0 %v1711
        %1859 = vmatpush2.msra.mxu0 %v1710
        %1860 = vmatprep.mubr.f32.mxu0 %v1644
        %1861 = vmatmul.mubr.f32.gmra.mxu0 %v1642
        %v1862 = vpop.f32.mrf.mxu0
        %v1863 = vadd.f32 %v1779, %v1862
        %v1864 = vpop.f32.mrf.mxu0
        %v1865 = vadd.f32 %v1783, %v1864
        %1866 = vdwg.mxu0
        %1867 = vmatprep.subr.mxu0 %v1709
        %1868 = vmatpush1.msra.mxu0 %v1708
        %1869 = vmatprep.subr.mxu0 %v1705
        %1870 = vmatpush1.msra.mxu0 %v1704
        %1871 = vmatprep.subr.mxu0 %v1701
        %1872 = vmatpush1.msra.mxu0 %v1700
        %1873 = vmatprep.subr.mxu0 %v1697
        %1874 = vmatpush1.msra.mxu0 %v1696
        %1875 = vmatprep.subr.mxu0 %v1693
        %1876 = vmatpush1.msra.mxu0 %v1692
        %1877 = vmatprep.subr.mxu0 %v1689
        %1878 = vmatpush1.msra.mxu0 %v1688
        %1879 = vmatprep.subr.mxu0 %v1685
        %1880 = vmatpush1.msra.mxu0 %v1684
        %1881 = vmatprep.subr.mxu0 %v1681
        %1882 = vmatpush1.msra.mxu0 %v1680
        %1883 = vmatprep.subr.mxu0 %v1677
        %1884 = vmatpush1.msra.mxu0 %v1676
        %1885 = vmatprep.subr.mxu0 %v1673
        %1886 = vmatpush1.msra.mxu0 %v1672
        %1887 = vmatprep.subr.mxu0 %v1669
        %1888 = vmatpush1.msra.mxu0 %v1668
        %1889 = vmatprep.subr.mxu0 %v1665
        %1890 = vmatpush1.msra.mxu0 %v1664
        %1891 = vmatprep.subr.mxu0 %v1661
        %1892 = vmatpush1.msra.mxu0 %v1660
        %1893 = vmatprep.subr.mxu0 %v1657
        %1894 = vmatpush1.msra.mxu0 %v1656
        %1895 = vmatprep.subr.mxu0 %v1653
        %1896 = vmatpush1.msra.mxu0 %v1652
        %1897 = vmatprep.subr.mxu0 %v1649
        %1898 = vmatpush1.msra.mxu0 %v1648
        %1899 = vmatprep.subr.mxu0 %v1773
        %1900 = vmatpush2.msra.mxu0 %v1772
        %1901 = vmatprep.subr.mxu0 %v1769
        %1902 = vmatpush2.msra.mxu0 %v1768
        %1903 = vmatprep.subr.mxu0 %v1765
        %1904 = vmatpush2.msra.mxu0 %v1764
        %1905 = vmatprep.subr.mxu0 %v1761
        %1906 = vmatpush2.msra.mxu0 %v1760
        %1907 = vmatprep.subr.mxu0 %v1757
        %1908 = vmatpush2.msra.mxu0 %v1756
        %1909 = vmatprep.subr.mxu0 %v1753
        %1910 = vmatpush2.msra.mxu0 %v1752
        %1911 = vmatprep.subr.mxu0 %v1749
        %1912 = vmatpush2.msra.mxu0 %v1748
        %1913 = vmatprep.subr.mxu0 %v1745
        %1914 = vmatpush2.msra.mxu0 %v1744
        %1915 = vmatprep.subr.mxu0 %v1741
        %1916 = vmatpush2.msra.mxu0 %v1740
        %1917 = vmatprep.subr.mxu0 %v1737
        %1918 = vmatpush2.msra.mxu0 %v1736
        %1919 = vmatprep.subr.mxu0 %v1733
        %1920 = vmatpush2.msra.mxu0 %v1732
        %1921 = vmatprep.subr.mxu0 %v1729
        %1922 = vmatpush2.msra.mxu0 %v1728
        %1923 = vmatprep.subr.mxu0 %v1725
        %1924 = vmatpush2.msra.mxu0 %v1724
        %1925 = vmatprep.subr.mxu0 %v1721
        %1926 = vmatpush2.msra.mxu0 %v1720
        %1927 = vmatprep.subr.mxu0 %v1717
        %1928 = vmatpush2.msra.mxu0 %v1716
        %1929 = vmatprep.subr.mxu0 %v1713
        %1930 = vmatpush2.msra.mxu0 %v1712
        %1931 = vmatprep.mubr.f32.mxu0 %v1644
        %1932 = vmatmul.mubr.f32.gmra.mxu0 %v1642
        %v1933 = vpop.f32.mrf.mxu0
        %v1934 = vadd.f32 %v1787, %v1933
        %v1935 = vpop.f32.mrf.mxu0
        %v1936 = vadd.f32 %v1791, %v1935
        %1937 = vdwg.mxu0
        %v1942 = vcombine.low %v1863, %v1865
        %v1943 = vcombine.low %v1934, %v1936
        %v1945 = vunpack.c.l.s4 1966171168
        %v1946 = vunpack.c.0.s8 %v1945
        %v1947 = vlaneseq
        %v1948 = vshrl.u32 %v1947, 7
        %v1949 = vsub.s32 %v1946, %v1948
        %v1950 = vrot.slane %v1942, %v1949
        %v1952 = vunpack.c.l.s4 1966171168
        %v1953 = vunpack.c.0.s8 %v1952
        %v1954 = vlaneseq
        %v1955 = vshrl.u32 %v1954, 7
        %v1956 = vsub.s32 %v1953, %v1955
        %v1957 = vrot.slane %v1943, %v1956
        %v1958 = vcombine.low %v1950, %v1957
        %v1960 = vunpack.c.l.s4 1966171168
        %v1961 = vunpack.c.0.s8 %v1960
        %v1962 = vlaneseq
        %v1963 = vshrl.u32 %v1962, 7
        %v1964 = vsub.s32 %v1961, %v1963
        %v1965 = vrot.slane %v1958, %v1964
        %v1967 = vlaneseq
        %vm1968 = vcmp.ge.s32.totalorder %v1967, 0
        %vm1969 = vcmp.lt.s32.totalorder %v1967, 512
        %vm1970 = vmand %vm1968, %vm1969
        %1971 = vst.msk [vmem:[%s501] sm:$0xf] %vm1970, %v1965
        %s1972 = sand.u32 %s297, 1
        %s1973 = scalar_lea.sflag [#allocation4], %s1972
        %s1974 = sand.u32 %s297, 1
        %s1975 = smul.addr %s1974, 4
        %s1976 = scalar_lea.vmem [#allocation13], %s1975
        // Predicated region
        $region93: #{tpu_custom_call.1} parent=67 // pred_check
          %p1977 = pneg %p307
        $region94: #{tpu_custom_call.1} parent=67 // pred_check_branch
          %1979 = sbr.rel (%p1977) target = $region96
        $region95: #{tpu_custom_call.1} parent=67 // pred_region
          %s1981 = ssub.s32 64, 64
          %1982 = vsyncadd %s1973, %s1981
          %s1983 = smul.addr %s32, 4
          %s1984 = smul.addr %s1983, 16
          %s1985 = scalar_lea.hbm %s12, %s1984
          %s1987 = sshll.u32 %s1976, 4
          %s1988 = int_to_ptr.vmem [resolvable:$true] %s1987
          %1990 = dma.vmem_to_hbm [thread:$0]  %s1988, 64, %s1985, %s1973
        $region96: #{tpu_custom_call.1} parent=67 // pred_fallthru
          _
      $region68: #{tpu_custom_call.1} parent=5 // pred_fallthru
        _
      %p1991 = scmp.le.s32.totalorder 2, %s27
      // Predicated region
      $region97: #{tpu_custom_call.1} parent=5 // pred_check
        %p1992 = pneg %p1991
      $region98: #{tpu_custom_call.1} parent=5 // pred_check_branch
        %1994 = sbr.rel (%p1992) target = $region100
      $region99: #{tpu_custom_call.1} parent=5 // pred_region
        %s1995 = ssub.s32 %s27, 2
        // Predicated region
        $region101: #{tpu_custom_call.1} parent=99 // pred_check
          %p1996 = pneg %p313
        $region102: #{tpu_custom_call.1} parent=99 // pred_check_branch
          %1998 = sbr.rel (%p1996) target = $region104
        $region103: #{tpu_custom_call.1} parent=99 // pred_region
          %s1999 = sand.u32 %s298, 1
          %s2000 = scalar_lea.sflag [#allocation4], %s1999
          %s2001 = sand.u32 %s298, 1
          %s2002 = smul.addr %s2001, 4
          %s2003 = scalar_lea.vmem [#allocation13], %s2002
          %2004 = dma.done %s2000, 64
        $region104: #{tpu_custom_call.1} parent=99 // pred_fallthru
          _
      $region100: #{tpu_custom_call.1} parent=5 // pred_fallthru
        _
    $region6: #{tpu_custom_call.1} parent=1 // loop_footer
      %s31 = sadd.s32 1, %s27
    $region7: #{tpu_custom_call.1} parent=1 // loop_footer_branch
      %26 = sbr.rel target = $region3
    $region8: #{tpu_custom_call.1} parent=1 // loop_exit
      _
    %2005 = vsyncpa [#allocation3], 1
    %s2006 = scalar_lea.sflag [#allocation3], 1
    %2007 = vsyncpa %s2006, 1
    %2008 = vsyncpa [#allocation6], 1
    %2009 = vsyncpa [#allocation9], 1
    %2010 = vsyncpa [#allocation12], 1
    %2011 = vsyncpa [#allocation4], 1
    %s2012 = scalar_lea.sflag [#allocation4], 1
    %2013 = vsyncpa %s2012, 1

</llo_original>
